<compile_context>
chip_gen: v7x
topology: tpu7x:2x2x1
jax: 0.10.0
libtpu: 0.0.40
codegen_flags: <defaults>
</compile_context>

<pallas_src>
import jax
import jax.numpy as jnp
from jax.experimental import pallas as pl
from jax.experimental.pallas import tpu as pltpu

INPUT_DIM = 28 * 28        # 784 (hardcoded by the module's view(-1, 28*28))
H1 = INPUT_DIM // 2        # 392
H2 = INPUT_DIM // 4        # 196
H3 = INPUT_DIM // 8        # 98
OUT = 10

# Lane-aligned (zero-padded) tail dims used inside the kernel.
H2P = 256                  # 196 -> 256
H3P = 128                  # 98  -> 128
OUTP = 128                 # 10  -> 128 (lane-dense output block)

MIN_TILE = 16              # bf16 sublane packing: batch tiles multiple of 16


def _round_up(v, m):
    return ((v + m - 1) // m) * m


def mlp4_kernel(x_ref, w1_ref, b1_ref, w2_ref, b2_ref, w3_ref, b3_ref,
                w4_ref, b4_ref, o_ref):
    # All four matmuls + ReLUs fused; all weights resident in VMEM.
    # x arrives f32 (single HBM pass); cast to bf16 here for the MXU.
    x = x_ref[...].astype(jnp.bfloat16)
    h = jnp.dot(x, w1_ref[...], preferred_element_type=jnp.float32)
    h = jnp.maximum(h + b1_ref[...], 0.0).astype(jnp.bfloat16)
    h = jnp.dot(h, w2_ref[...], preferred_element_type=jnp.float32)
    h = jnp.maximum(h + b2_ref[...], 0.0).astype(jnp.bfloat16)
    h = jnp.dot(h, w3_ref[...], preferred_element_type=jnp.float32)
    h = jnp.maximum(h + b3_ref[...], 0.0).astype(jnp.bfloat16)
    h = jnp.dot(h, w4_ref[...], preferred_element_type=jnp.float32)
    o_ref[...] = h + b4_ref[...]          # (tb, 128) lane-dense f32 store


def mlp4_forward(x, packed_params, *, tb=512):
    """x: any shape whose trailing dims flatten to 784 per row (like PyTorch
    view(-1, 784)). `packed_params` comes from pack_params(). Returns (B, 10)
    float32 logits."""
    w1, b1, w2, b2, w3, b3, w4, b4 = packed_params
    if x.dtype != jnp.float32:
        x = x.astype(jnp.float32)         # PyTorch's .float()
    x = x.reshape(-1, INPUT_DIM)
    B = x.shape[0]

    # --- choose the batch tile -------------------------------------------
    tile = _round_up(max(1, min(tb, B)), MIN_TILE)
    # v7x megacore: if one tile would swallow the whole batch but the batch is
    # big enough to split, halve it so both TensorCores get work.
    if B > 2 * MIN_TILE and _round_up(B, tile) == tile:
        tile = _round_up((B + 1) // 2, MIN_TILE)
    n_blocks = (B + tile - 1) // tile
    Bp = n_blocks * tile

    # --- pad batch to a tile multiple (only when needed) -------------------
    if Bp != B:
        x = jnp.pad(x, ((0, Bp - B), (0, 0)))

    full = lambda r, c: pl.BlockSpec((r, c), lambda i: (0, 0))
    grid_spec = pltpu.PrefetchScalarGridSpec(
        num_scalar_prefetch=0,
        grid=(n_blocks,),
        in_specs=[
            pl.BlockSpec((tile, INPUT_DIM), lambda i: (i, 0)),   # x tile (f32)
            full(INPUT_DIM, H1), full(1, H1),
            full(H1, H2P),       full(1, H2P),
            full(H2P, H3P),      full(1, H3P),
            full(H3P, OUTP),     full(1, OUTP),
        ],
        out_specs=pl.BlockSpec((tile, OUTP), lambda i: (i, 0)),
    )

    padded_macs = INPUT_DIM * H1 + H1 * H2P + H2P * H3P + H3P * OUTP
    weight_bytes = padded_macs * 2 + (H1 + H2P + H3P + OUTP) * 4
    cost = pl.CostEstimate(
        flops=2 * Bp * padded_macs,
        transcendentals=0,
        bytes_accessed=Bp * INPUT_DIM * 4 + Bp * OUTP * 4 + weight_bytes,
    )

    out = pl.pallas_call(
        mlp4_kernel,
        out_shape=jax.ShapeDtypeStruct((Bp, OUTP), jnp.float32),
        grid_spec=grid_spec,
        compiler_params=pltpu.CompilerParams(
            dimension_semantics=("parallel",),
            vmem_limit_bytes=64 * 1024 * 1024,
        ),
        cost_estimate=cost,
    )(x, w1, b1, w2, b2, w3, b3, w4, b4)

    return out[:B, :OUT]


def init_params(key):
    """Deterministic synthetic init (PyTorch-style uniform). Weights stored as
    (in, out) in f32; biases as (out,)."""
    dims = [(INPUT_DIM, H1), (H1, H2), (H2, H3), (H3, OUT)]
    params = []
    for i, (din, dout) in enumerate(dims):
        kw, kb = jax.random.split(jax.random.fold_in(key, i))
        scale = 1.0 / jnp.sqrt(jnp.float32(din))
        w = jax.random.uniform(kw, (din, dout), jnp.float32, -scale, scale)
        b = jax.random.uniform(kb, (dout,), jnp.float32, -scale, scale)
        params += [w, b]
    return tuple(params)


def pack_params(params):
    """Zero-pad tail dims to lane-aligned sizes and cast weights to bf16
    (biases stay f32; bias-add/ReLU run in f32 inside the kernel)."""
    w1, b1, w2, b2, w3, b3, w4, b4 = params

    def pad2(a, rows, cols):
        r, c = a.shape
        return jnp.pad(a, ((0, rows - r), (0, cols - c)))

    w1p = w1.astype(jnp.bfloat16)                                  # (784, 392)
    b1p = b1.reshape(1, -1).astype(jnp.float32)                    # (1, 392)
    w2p = pad2(w2, H1, H2P).astype(jnp.bfloat16)                   # (392, 256)
    b2p = pad2(b2.reshape(1, -1), 1, H2P).astype(jnp.float32)      # (1, 256)
    w3p = pad2(w3, H2P, H3P).astype(jnp.bfloat16)                  # (256, 128)
    b3p = pad2(b3.reshape(1, -1), 1, H3P).astype(jnp.float32)      # (1, 128)
    w4p = pad2(w4, H3P, OUTP).astype(jnp.bfloat16)                 # (128, 128)
    b4p = pad2(b4.reshape(1, -1), 1, OUTP).astype(jnp.float32)     # (1, 128)
    return (w1p, b1p, w2p, b2p, w3p, b3p, w4p, b4p)


def mlp4_reference(x, params):
    w1, b1, w2, b2, w3, b3, w4, b4 = params
    x = x.astype(jnp.float32).reshape(-1, INPUT_DIM)
    h = jnp.maximum(x @ w1 + b1, 0.0)
    h = jnp.maximum(h @ w2 + b2, 0.0)
    h = jnp.maximum(h @ w3 + b3, 0.0)
    return h @ w4 + b4


if __name__ == "__main__":
    key = jax.random.PRNGKey(0)
    kp, kx = jax.random.split(key)
    params = init_params(kp)
    packed = pack_params(params)

    # 6 images of shape (1, 28, 28): batch is NOT a tile multiple, exercising
    # the padding path; flattened to (6, 784) by the forward pass.
    x = jax.random.normal(kx, (6, 1, 28, 28), jnp.float32)

    out = mlp4_forward(x, packed)
    jax.block_until_ready(out)

    ref = mlp4_reference(x, params)
    assert out.shape == (6, 10)
    # bf16 matmul inputs (f32 accumulation) -> looser tolerance than pure f32.
    err = float(jnp.max(jnp.abs(out - ref)))
    assert jnp.allclose(out, ref, atol=5e-2, rtol=5e-2), f"max abs err {err}"
    print("KERNEL_OK")
</pallas_src>

<mosaic_0001>
module attributes {stable_mosaic.version = 11 : i64} {
  func.func @mlp4_kernel(%arg0: i32, %arg1: memref<16x784xf32, #tpu.memory_space<vmem>>, %arg2: memref<784x392xbf16, #tpu.memory_space<vmem>>, %arg3: memref<1x392xf32, #tpu.memory_space<vmem>>, %arg4: memref<392x256xbf16, #tpu.memory_space<vmem>>, %arg5: memref<1x256xf32, #tpu.memory_space<vmem>>, %arg6: memref<256x128xbf16, #tpu.memory_space<vmem>>, %arg7: memref<1x128xf32, #tpu.memory_space<vmem>>, %arg8: memref<128x128xbf16, #tpu.memory_space<vmem>>, %arg9: memref<1x128xf32, #tpu.memory_space<vmem>>, %arg10: memref<16x128xf32, #tpu.memory_space<vmem>>) attributes {dimension_semantics = [#tpu.dimension_semantics<parallel>], iteration_bounds = array<i64: 1>, scalar_prefetch = 0 : i64, scratch_operands = 0 : i64, tpu.core_type = #tpu.core_type<tc>, window_params = [{transform_indices = @transform_0, window_bounds = array<i64: 16, 784>}, {pipeline_mode = #tpu.pipeline_mode<synchronous>, transform_indices = @transform_1, window_bounds = array<i64: 784, 392>}, {pipeline_mode = #tpu.pipeline_mode<synchronous>, transform_indices = @transform_2, window_bounds = array<i64: 1, 392>}, {pipeline_mode = #tpu.pipeline_mode<synchronous>, transform_indices = @transform_3, window_bounds = array<i64: 392, 256>}, {pipeline_mode = #tpu.pipeline_mode<synchronous>, transform_indices = @transform_4, window_bounds = array<i64: 1, 256>}, {pipeline_mode = #tpu.pipeline_mode<synchronous>, transform_indices = @transform_5, window_bounds = array<i64: 256, 128>}, {pipeline_mode = #tpu.pipeline_mode<synchronous>, transform_indices = @transform_6, window_bounds = array<i64: 1, 128>}, {pipeline_mode = #tpu.pipeline_mode<synchronous>, transform_indices = @transform_7, window_bounds = array<i64: 128, 128>}, {pipeline_mode = #tpu.pipeline_mode<synchronous>, transform_indices = @transform_8, window_bounds = array<i64: 1, 128>}, {transform_indices = @transform_9, window_bounds = array<i64: 16, 128>}]} {
    %c0 = arith.constant 0 : index
    %c0_0 = arith.constant 0 : index
    %0 = vector.load %arg1[%c0, %c0_0] : memref<16x784xf32, #tpu.memory_space<vmem>>, vector<16x784xf32>
    %1 = arith.truncf %0 : vector<16x784xf32> to vector<16x784xbf16>
    %c0_1 = arith.constant 0 : index
    %c0_2 = arith.constant 0 : index
    %2 = vector.load %arg2[%c0_1, %c0_2] : memref<784x392xbf16, #tpu.memory_space<vmem>>, vector<784x392xbf16>
    %cst = arith.constant dense<0.000000e+00> : vector<16x392xf32>
    %3 = tpu.matmul %1, %2, %cst {dimension_numbers = #tpu.dot_dimension_numbers<[1], [0], [0], [1], [0, 0, 1, 1], [], []>} : vector<16x784xbf16>, vector<784x392xbf16>, vector<16x392xf32> -> vector<16x392xf32>
    %c0_3 = arith.constant 0 : index
    %c0_4 = arith.constant 0 : index
    %4 = vector.load %arg3[%c0_3, %c0_4] : memref<1x392xf32, #tpu.memory_space<vmem>>, vector<1x392xf32>
    %5 = vector.broadcast %4 : vector<1x392xf32> to vector<16x392xf32>
    %6 = arith.addf %3, %5 : vector<16x392xf32>
    %cst_5 = arith.constant 0.000000e+00 : f32
    %7 = vector.broadcast %cst_5 : f32 to vector<16x392xf32>
    %8 = arith.maximumf %6, %7 : vector<16x392xf32>
    %9 = arith.truncf %8 : vector<16x392xf32> to vector<16x392xbf16>
    %c0_6 = arith.constant 0 : index
    %c0_7 = arith.constant 0 : index
    %10 = vector.load %arg4[%c0_6, %c0_7] : memref<392x256xbf16, #tpu.memory_space<vmem>>, vector<392x256xbf16>
    %cst_8 = arith.constant dense<0.000000e+00> : vector<16x256xf32>
    %11 = tpu.matmul %9, %10, %cst_8 {dimension_numbers = #tpu.dot_dimension_numbers<[1], [0], [0], [1], [0, 0, 1, 1], [], []>} : vector<16x392xbf16>, vector<392x256xbf16>, vector<16x256xf32> -> vector<16x256xf32>
    %c0_9 = arith.constant 0 : index
    %c0_10 = arith.constant 0 : index
    %12 = vector.load %arg5[%c0_9, %c0_10] : memref<1x256xf32, #tpu.memory_space<vmem>>, vector<1x256xf32>
    %13 = vector.broadcast %12 : vector<1x256xf32> to vector<16x256xf32>
    %14 = arith.addf %11, %13 : vector<16x256xf32>
    %cst_11 = arith.constant 0.000000e+00 : f32
    %15 = vector.broadcast %cst_11 : f32 to vector<16x256xf32>
    %16 = arith.maximumf %14, %15 : vector<16x256xf32>
    %17 = arith.truncf %16 : vector<16x256xf32> to vector<16x256xbf16>
    %c0_12 = arith.constant 0 : index
    %c0_13 = arith.constant 0 : index
    %18 = vector.load %arg6[%c0_12, %c0_13] : memref<256x128xbf16, #tpu.memory_space<vmem>>, vector<256x128xbf16>
    %cst_14 = arith.constant dense<0.000000e+00> : vector<16x128xf32>
    %19 = tpu.matmul %17, %18, %cst_14 {dimension_numbers = #tpu.dot_dimension_numbers<[1], [0], [0], [1], [0, 0, 1, 1], [], []>} : vector<16x256xbf16>, vector<256x128xbf16>, vector<16x128xf32> -> vector<16x128xf32>
    %c0_15 = arith.constant 0 : index
    %c0_16 = arith.constant 0 : index
    %20 = vector.load %arg7[%c0_15, %c0_16] : memref<1x128xf32, #tpu.memory_space<vmem>>, vector<1x128xf32>
    %21 = vector.broadcast %20 : vector<1x128xf32> to vector<16x128xf32>
    %22 = arith.addf %19, %21 : vector<16x128xf32>
    %cst_17 = arith.constant 0.000000e+00 : f32
    %23 = vector.broadcast %cst_17 : f32 to vector<16x128xf32>
    %24 = arith.maximumf %22, %23 : vector<16x128xf32>
    %25 = arith.truncf %24 : vector<16x128xf32> to vector<16x128xbf16>
    %c0_18 = arith.constant 0 : index
    %c0_19 = arith.constant 0 : index
    %26 = vector.load %arg8[%c0_18, %c0_19] : memref<128x128xbf16, #tpu.memory_space<vmem>>, vector<128x128xbf16>
    %cst_20 = arith.constant dense<0.000000e+00> : vector<16x128xf32>
    %27 = tpu.matmul %25, %26, %cst_20 {dimension_numbers = #tpu.dot_dimension_numbers<[1], [0], [0], [1], [0, 0, 1, 1], [], []>} : vector<16x128xbf16>, vector<128x128xbf16>, vector<16x128xf32> -> vector<16x128xf32>
    %c0_21 = arith.constant 0 : index
    %c0_22 = arith.constant 0 : index
    %28 = vector.load %arg9[%c0_21, %c0_22] : memref<1x128xf32, #tpu.memory_space<vmem>>, vector<1x128xf32>
    %29 = vector.broadcast %28 : vector<1x128xf32> to vector<16x128xf32>
    %30 = arith.addf %27, %29 : vector<16x128xf32>
    %c0_23 = arith.constant 0 : index
    %c0_24 = arith.constant 0 : index
    %31 = vector.load %arg10[%c0_23, %c0_24] : memref<16x128xf32, #tpu.memory_space<vmem>>, vector<16x128xf32>
    tpu.vector_store %arg10[%c0_23, %c0_24], %30 {strides = array<i32>} : memref<16x128xf32, #tpu.memory_space<vmem>>, vector<16x128xf32>,
    return
  }
  func.func @transform_0(%arg0: i32) -> (i32, i32) {
    %c0_i32 = arith.constant 0 : i32
    %c0_i32_0 = arith.constant 0 : i32
    return %arg0, %c0_i32 : i32, i32
  }
  func.func @transform_1(%arg0: i32) -> (i32, i32) {
    %c0_i32 = arith.constant 0 : i32
    %c0_i32_0 = arith.constant 0 : i32
    %c0_i32_1 = arith.constant 0 : i32
    return %c0_i32, %c0_i32_0 : i32, i32
  }
  func.func @transform_2(%arg0: i32) -> (i32, i32) {
    %c0_i32 = arith.constant 0 : i32
    %c0_i32_0 = arith.constant 0 : i32
    %c0_i32_1 = arith.constant 0 : i32
    return %c0_i32, %c0_i32_0 : i32, i32
  }
  func.func @transform_3(%arg0: i32) -> (i32, i32) {
    %c0_i32 = arith.constant 0 : i32
    %c0_i32_0 = arith.constant 0 : i32
    %c0_i32_1 = arith.constant 0 : i32
    return %c0_i32, %c0_i32_0 : i32, i32
  }
  func.func @transform_4(%arg0: i32) -> (i32, i32) {
    %c0_i32 = arith.constant 0 : i32
    %c0_i32_0 = arith.constant 0 : i32
    %c0_i32_1 = arith.constant 0 : i32
    return %c0_i32, %c0_i32_0 : i32, i32
  }
  func.func @transform_5(%arg0: i32) -> (i32, i32) {
    %c0_i32 = arith.constant 0 : i32
    %c0_i32_0 = arith.constant 0 : i32
    %c0_i32_1 = arith.constant 0 : i32
    return %c0_i32, %c0_i32_0 : i32, i32
  }
  func.func @transform_6(%arg0: i32) -> (i32, i32) {
    %c0_i32 = arith.constant 0 : i32
    %c0_i32_0 = arith.constant 0 : i32
    %c0_i32_1 = arith.constant 0 : i32
    return %c0_i32, %c0_i32_0 : i32, i32
  }
  func.func @transform_7(%arg0: i32) -> (i32, i32) {
    %c0_i32 = arith.constant 0 : i32
    %c0_i32_0 = arith.constant 0 : i32
    %c0_i32_1 = arith.constant 0 : i32
    return %c0_i32, %c0_i32_0 : i32, i32
  }
  func.func @transform_8(%arg0: i32) -> (i32, i32) {
    %c0_i32 = arith.constant 0 : i32
    %c0_i32_0 = arith.constant 0 : i32
    %c0_i32_1 = arith.constant 0 : i32
    return %c0_i32, %c0_i32_0 : i32, i32
  }
  func.func @transform_9(%arg0: i32) -> (i32, i32) {
    %c0_i32 = arith.constant 0 : i32
    %c0_i32_0 = arith.constant 0 : i32
    return %arg0, %c0_i32 : i32, i32
  }
}

</mosaic_0001>

<llo_original>
// kernel: tpu_custom_call.1
$region0: #{tpu_custom_call.1}
  #allocation0 [shape = 'u32[]', space=smem, size = 0x4, offset = 0x4, fixed_abs, tag = 'smem constant byte address 0x4 - core index']
  #allocation1 [shape = 'u32[144,128]{1,0:T(1,128)}', space=vmem, size = 0x12000, scoped, tag = 'internal scratch']
  %s0 = inlined_call_operand.hbm [shape: f32[16,784], index: 0, kind: input, shape index: {}]
  %s1 = inlined_call_operand.hbm [shape: bf16[784,392], index: 1, kind: input, shape index: {}]
  %s2 = inlined_call_operand.hbm [shape: f32[1,392], index: 2, kind: input, shape index: {}]
  %s3 = inlined_call_operand.hbm [shape: bf16[392,256], index: 3, kind: input, shape index: {}]
  %s4 = inlined_call_operand.hbm [shape: f32[1,256], index: 4, kind: input, shape index: {}]
  %s5 = inlined_call_operand.hbm [shape: bf16[256,128], index: 5, kind: input, shape index: {}]
  %s6 = inlined_call_operand.hbm [shape: f32[1,128], index: 6, kind: input, shape index: {}]
  %s7 = inlined_call_operand.hbm [shape: bf16[128,128], index: 7, kind: input, shape index: {}]
  %s8 = inlined_call_operand.hbm [shape: f32[1,128], index: 8, kind: input, shape index: {}]
  %s9 = inlined_call_operand.hbm [shape: f32[16,128], index: 9, kind: output, shape index: {}]
  %s10 = sld [smem:[#allocation0]]
  $region82: #{tpu_custom_call.1} parent=0
    _
  %s12 = ssub.s32 1, %s10
  %s13 = scalar_select 0, %s12, %s10
  $region1: #{tpu_custom_call.1} parent=0
    #allocation2 [shape = 'u8[57344]{0}', space=vmem, size = 0xe000, scoped, tag = 'input window, operand 0, single buffered']
    #allocation3 [shape = 's32[1]{0}', space=sflag, size = 0x4, scoped, tag = 'scoped memory for tpu_custom_call.1']
    #allocation4 [shape = 's32[1]{0}', space=sflag, size = 0x4, scoped, tag = 'scoped memory for tpu_custom_call.1']
    #allocation5 [shape = 'u8[802816]{0}', space=vmem, size = 0xc4000, scoped, tag = 'input window, operand 1, single buffered']
    #allocation6 [shape = 's32[1]{0}', space=sflag, size = 0x4, scoped, tag = 'scoped memory for tpu_custom_call.1']
    #allocation7 [shape = 'u8[2048]{0}', space=vmem, size = 0x800, scoped, tag = 'input window, operand 2, single buffered']
    #allocation8 [shape = 'u8[200704]{0}', space=vmem, size = 0x31000, scoped, tag = 'input window, operand 3, single buffered']
    #allocation9 [shape = 's32[1]{0}', space=sflag, size = 0x4, scoped, tag = 'scoped memory for tpu_custom_call.1']
    #allocation10 [shape = 'u8[1024]{0}', space=vmem, size = 0x400, scoped, tag = 'input window, operand 4, single buffered']
    #allocation11 [shape = 'u8[65536]{0}', space=vmem, size = 0x10000, scoped, tag = 'input window, operand 5, single buffered']
    #allocation12 [shape = 's32[1]{0}', space=sflag, size = 0x4, scoped, tag = 'scoped memory for tpu_custom_call.1']
    #allocation13 [shape = 'u8[512]{0}', space=vmem, size = 0x400, scoped, tag = 'input window, operand 6, single buffered']
    #allocation14 [shape = 'u8[32768]{0}', space=vmem, size = 0x8000, scoped, tag = 'input window, operand 7, single buffered']
    #allocation15 [shape = 's32[1]{0}', space=sflag, size = 0x4, scoped, tag = 'scoped memory for tpu_custom_call.1']
    #allocation16 [shape = 'u8[512]{0}', space=vmem, size = 0x400, scoped, tag = 'input window, operand 8, single buffered']
    #allocation17 [shape = 'u8[8192]{0}', space=vmem, size = 0x2000, scoped, tag = 'output window, operand 0, single buffered']
    %14 = vsyncpa [#allocation3], 0
    %15 = vsyncpa [#allocation6], 0
    %16 = vsyncpa [#allocation9], 0
    %17 = vsyncpa [#allocation12], 0
    %18 = vsyncpa [#allocation15], 0
    %19 = vsyncpa [#allocation4], 0
    // Predicated region
    $region2: #{tpu_custom_call.1} parent=1 // pred_check
      _
    $region3: #{tpu_custom_call.1} parent=1 // pred_check_branch
      %21 = sbr.rel (0) target = $region5
    $region4: #{tpu_custom_call.1} parent=1 // pred_region
      %s23 = ssub.s32 1792, 1792
      %24 = vsyncadd [#allocation3], %s23
      %s25 = sshll.u32 [#allocation2], 4
      %s26 = int_to_ptr.vmem [resolvable:$true] %s25
      %31 = dma.hbm_to_vmem [thread:$0]  %s0, 1792, %s26, [#allocation3], 896, 896, 56
    $region5: #{tpu_custom_call.1} parent=1 // pred_fallthru
      _
    // Predicated region
    $region6: #{tpu_custom_call.1} parent=1 // pred_check
      _
    $region7: #{tpu_custom_call.1} parent=1 // pred_check_branch
      %33 = sbr.rel (0) target = $region9
    $region8: #{tpu_custom_call.1} parent=1 // pred_region
      %s35 = ssub.s32 25088, 25088
      %36 = vsyncadd [#allocation6], %s35
      %s37 = sshll.u32 [#allocation5], 4
      %s38 = int_to_ptr.vmem [resolvable:$true] %s37
      %43 = dma.hbm_to_vmem [thread:$0]  %s1, 25088, %s38, [#allocation6], 256, 256, 16
    $region9: #{tpu_custom_call.1} parent=1 // pred_fallthru
      _
    // Predicated region
    $region10: #{tpu_custom_call.1} parent=1 // pred_check
      _
    $region11: #{tpu_custom_call.1} parent=1 // pred_check_branch
      %45 = sbr.rel (0) target = $region13
    $region12: #{tpu_custom_call.1} parent=1 // pred_region
      %s47 = ssub.s32 64, 64
      %48 = vsyncadd [#allocation6], %s47
      %s50 = sshll.u32 [#allocation7], 4
      %s51 = int_to_ptr.vmem [resolvable:$true] %s50
      %53 = dma.hbm_to_vmem [thread:$0]  %s2, 64, %s51, [#allocation6]
    $region13: #{tpu_custom_call.1} parent=1 // pred_fallthru
      _
    // Predicated region
    $region14: #{tpu_custom_call.1} parent=1 // pred_check
      _
    $region15: #{tpu_custom_call.1} parent=1 // pred_check_branch
      %55 = sbr.rel (0) target = $region17
    $region16: #{tpu_custom_call.1} parent=1 // pred_region
      %s57 = ssub.s32 6272, 6272
      %58 = vsyncadd [#allocation9], %s57
      %s59 = sshll.u32 [#allocation8], 4
      %s60 = int_to_ptr.vmem [resolvable:$true] %s59
      %65 = dma.hbm_to_vmem [thread:$0]  %s3, 6272, %s60, [#allocation9], 128, 128, 8
    $region17: #{tpu_custom_call.1} parent=1 // pred_fallthru
      _
    // Predicated region
    $region18: #{tpu_custom_call.1} parent=1 // pred_check
      _
    $region19: #{tpu_custom_call.1} parent=1 // pred_check_branch
      %67 = sbr.rel (0) target = $region21
    $region20: #{tpu_custom_call.1} parent=1 // pred_region
      %s69 = ssub.s32 32, 32
      %70 = vsyncadd [#allocation9], %s69
      %s72 = sshll.u32 [#allocation10], 4
      %s73 = int_to_ptr.vmem [resolvable:$true] %s72
      %75 = dma.hbm_to_vmem [thread:$0]  %s4, 32, %s73, [#allocation9]
    $region21: #{tpu_custom_call.1} parent=1 // pred_fallthru
      _
    // Predicated region
    $region22: #{tpu_custom_call.1} parent=1 // pred_check
      _
    $region23: #{tpu_custom_call.1} parent=1 // pred_check_branch
      %77 = sbr.rel (0) target = $region25
    $region24: #{tpu_custom_call.1} parent=1 // pred_region
      %s79 = ssub.s32 2048, 2048
      %80 = vsyncadd [#allocation12], %s79
      %s81 = sshll.u32 [#allocation11], 4
      %s82 = int_to_ptr.vmem [resolvable:$true] %s81
      %87 = dma.hbm_to_vmem [thread:$0]  %s5, 2048, %s82, [#allocation12], 64, 64, 4
    $region25: #{tpu_custom_call.1} parent=1 // pred_fallthru
      _
    // Predicated region
    $region26: #{tpu_custom_call.1} parent=1 // pred_check
      _
    $region27: #{tpu_custom_call.1} parent=1 // pred_check_branch
      %89 = sbr.rel (0) target = $region29
    $region28: #{tpu_custom_call.1} parent=1 // pred_region
      %s91 = ssub.s32 16, 16
      %92 = vsyncadd [#allocation12], %s91
      %s94 = sshll.u32 [#allocation13], 4
      %s95 = int_to_ptr.vmem [resolvable:$true] %s94
      %97 = dma.hbm_to_vmem [thread:$0]  %s6, 16, %s95, [#allocation12]
    $region29: #{tpu_custom_call.1} parent=1 // pred_fallthru
      _
    // Predicated region
    $region30: #{tpu_custom_call.1} parent=1 // pred_check
      _
    $region31: #{tpu_custom_call.1} parent=1 // pred_check_branch
      %99 = sbr.rel (0) target = $region33
    $region32: #{tpu_custom_call.1} parent=1 // pred_region
      %s101 = ssub.s32 1024, 1024
      %102 = vsyncadd [#allocation15], %s101
      %s103 = sshll.u32 [#allocation14], 4
      %s104 = int_to_ptr.vmem [resolvable:$true] %s103
      %109 = dma.hbm_to_vmem [thread:$0]  %s7, 1024, %s104, [#allocation15], 64, 64, 4
    $region33: #{tpu_custom_call.1} parent=1 // pred_fallthru
      _
    // Predicated region
    $region34: #{tpu_custom_call.1} parent=1 // pred_check
      _
    $region35: #{tpu_custom_call.1} parent=1 // pred_check_branch
      %111 = sbr.rel (0) target = $region37
    $region36: #{tpu_custom_call.1} parent=1 // pred_region
      %s113 = ssub.s32 16, 16
      %114 = vsyncadd [#allocation15], %s113
      %s116 = sshll.u32 [#allocation16], 4
      %s117 = int_to_ptr.vmem [resolvable:$true] %s116
      %119 = dma.hbm_to_vmem [thread:$0]  %s8, 16, %s117, [#allocation15]
    $region37: #{tpu_custom_call.1} parent=1 // pred_fallthru
      _
    // Predicated region
    $region38: #{tpu_custom_call.1} parent=1 // pred_check
      _
    $region39: #{tpu_custom_call.1} parent=1 // pred_check_branch
      %121 = sbr.rel (0) target = $region41
    $region40: #{tpu_custom_call.1} parent=1 // pred_region
      %122 = dma.done [#allocation3], 1792
    $region41: #{tpu_custom_call.1} parent=1 // pred_fallthru
      _
    // Predicated region
    $region42: #{tpu_custom_call.1} parent=1 // pred_check
      _
    $region43: #{tpu_custom_call.1} parent=1 // pred_check_branch
      %124 = sbr.rel (0) target = $region45
    $region44: #{tpu_custom_call.1} parent=1 // pred_region
      %125 = dma.done [#allocation6], 25088
    $region45: #{tpu_custom_call.1} parent=1 // pred_fallthru
      _
    // Predicated region
    $region46: #{tpu_custom_call.1} parent=1 // pred_check
      _
    $region47: #{tpu_custom_call.1} parent=1 // pred_check_branch
      %127 = sbr.rel (0) target = $region49
    $region48: #{tpu_custom_call.1} parent=1 // pred_region
      %128 = dma.done [#allocation6], 64
    $region49: #{tpu_custom_call.1} parent=1 // pred_fallthru
      _
    // Predicated region
    $region50: #{tpu_custom_call.1} parent=1 // pred_check
      _
    $region51: #{tpu_custom_call.1} parent=1 // pred_check_branch
      %130 = sbr.rel (0) target = $region53
    $region52: #{tpu_custom_call.1} parent=1 // pred_region
      %131 = dma.done [#allocation9], 6272
    $region53: #{tpu_custom_call.1} parent=1 // pred_fallthru
      _
    // Predicated region
    $region54: #{tpu_custom_call.1} parent=1 // pred_check
      _
    $region55: #{tpu_custom_call.1} parent=1 // pred_check_branch
      %133 = sbr.rel (0) target = $region57
    $region56: #{tpu_custom_call.1} parent=1 // pred_region
      %134 = dma.done [#allocation9], 32
    $region57: #{tpu_custom_call.1} parent=1 // pred_fallthru
      _
    // Predicated region
    $region58: #{tpu_custom_call.1} parent=1 // pred_check
      _
    $region59: #{tpu_custom_call.1} parent=1 // pred_check_branch
      %136 = sbr.rel (0) target = $region61
    $region60: #{tpu_custom_call.1} parent=1 // pred_region
      %137 = dma.done [#allocation12], 2048
    $region61: #{tpu_custom_call.1} parent=1 // pred_fallthru
      _
    // Predicated region
    $region62: #{tpu_custom_call.1} parent=1 // pred_check
      _
    $region63: #{tpu_custom_call.1} parent=1 // pred_check_branch
      %139 = sbr.rel (0) target = $region65
    $region64: #{tpu_custom_call.1} parent=1 // pred_region
      %140 = dma.done [#allocation12], 16
    $region65: #{tpu_custom_call.1} parent=1 // pred_fallthru
      _
    // Predicated region
    $region66: #{tpu_custom_call.1} parent=1 // pred_check
      _
    $region67: #{tpu_custom_call.1} parent=1 // pred_check_branch
      %142 = sbr.rel (0) target = $region69
    $region68: #{tpu_custom_call.1} parent=1 // pred_region
      %143 = dma.done [#allocation15], 1024
    $region69: #{tpu_custom_call.1} parent=1 // pred_fallthru
      _
    // Predicated region
    $region70: #{tpu_custom_call.1} parent=1 // pred_check
      _
    $region71: #{tpu_custom_call.1} parent=1 // pred_check_branch
      %145 = sbr.rel (0) target = $region73
    $region72: #{tpu_custom_call.1} parent=1 // pred_region
      %146 = dma.done [#allocation15], 16
    $region73: #{tpu_custom_call.1} parent=1 // pred_fallthru
      _
    %v148 = vld [vmem:[#allocation2] sm:$0xff]
    %v149 = vld [vmem:[#allocation2 + $0x8] sm:$0xff]
    %v150 = vld [vmem:[#allocation2 + $0x10] sm:$0xff]
    %v151 = vld [vmem:[#allocation2 + $0x18] sm:$0xff]
    %v152 = vld [vmem:[#allocation2 + $0x20] sm:$0xff]
    %v153 = vld [vmem:[#allocation2 + $0x28] sm:$0xff]
    %v154 = vld [vmem:[#allocation2 + $0x30] sm:$0xff]
    %v155 = vld [vmem:[#allocation2 + $0x38] sm:$0xff]
    %v156 = vld [vmem:[#allocation2 + $0x40] sm:$0xff]
    %v157 = vld [vmem:[#allocation2 + $0x48] sm:$0xff]
    %v158 = vld [vmem:[#allocation2 + $0x50] sm:$0xff]
    %v159 = vld [vmem:[#allocation2 + $0x58] sm:$0xff]
    %v160 = vld [vmem:[#allocation2 + $0x60] sm:$0xff]
    %v161 = vld [vmem:[#allocation2 + $0x68] sm:$0xff]
    %v162 = vpack.c.bf16 %v155, %v148
    %v163 = vpack.c.bf16 %v156, %v149
    %v164 = vpack.c.bf16 %v157, %v150
    %v165 = vpack.c.bf16 %v158, %v151
    %v166 = vpack.c.bf16 %v159, %v152
    %v167 = vpack.c.bf16 %v160, %v153
    %v168 = vpack.c.bf16 %v161, %v154
    %v169 = vld [vmem:[#allocation5] sm:$0xff]
    %v170 = vld [vmem:[#allocation5 + $0x8] sm:$0xff]
    %v171 = vld [vmem:[#allocation5 + $0x10] sm:$0xff]
    %v172 = vld [vmem:[#allocation5 + $0x18] sm:$0xff]
    %v173 = vld [vmem:[#allocation5 + $0x20] sm:$0xff]
    %v174 = vld [vmem:[#allocation5 + $0x28] sm:$0xff]
    %v175 = vld [vmem:[#allocation5 + $0x30] sm:$0xff]
    %v176 = vld [vmem:[#allocation5 + $0x38] sm:$0xff]
    %v177 = vld [vmem:[#allocation5 + $0x40] sm:$0xff]
    %v178 = vld [vmem:[#allocation5 + $0x48] sm:$0xff]
    %v179 = vld [vmem:[#allocation5 + $0x50] sm:$0xff]
    %v180 = vld [vmem:[#allocation5 + $0x58] sm:$0xff]
    %v181 = vld [vmem:[#allocation5 + $0x60] sm:$0xff]
    %v182 = vld [vmem:[#allocation5 + $0x68] sm:$0xff]
    %v183 = vld [vmem:[#allocation5 + $0x70] sm:$0xff]
    %v184 = vld [vmem:[#allocation5 + $0x78] sm:$0xff]
    %v185 = vld [vmem:[#allocation5 + $0x80] sm:$0xff]
    %v186 = vld [vmem:[#allocation5 + $0x88] sm:$0xff]
    %v187 = vld [vmem:[#allocation5 + $0x90] sm:$0xff]
    %v188 = vld [vmem:[#allocation5 + $0x98] sm:$0xff]
    %v189 = vld [vmem:[#allocation5 + $0xa0] sm:$0xff]
    %v190 = vld [vmem:[#allocation5 + $0xa8] sm:$0xff]
    %v191 = vld [vmem:[#allocation5 + $0xb0] sm:$0xff]
    %v192 = vld [vmem:[#allocation5 + $0xb8] sm:$0xff]
    %v193 = vld [vmem:[#allocation5 + $0xc0] sm:$0xff]
    %v194 = vld [vmem:[#allocation5 + $0xc8] sm:$0xff]
    %v195 = vld [vmem:[#allocation5 + $0xd0] sm:$0xff]
    %v196 = vld [vmem:[#allocation5 + $0xd8] sm:$0xff]
    %v197 = vld [vmem:[#allocation5 + $0xe0] sm:$0xff]
    %v198 = vld [vmem:[#allocation5 + $0xe8] sm:$0xff]
    %v199 = vld [vmem:[#allocation5 + $0xf0] sm:$0xff]
    %v200 = vld [vmem:[#allocation5 + $0xf8] sm:$0xff]
    %v201 = vld [vmem:[#allocation5 + $0x100] sm:$0xff]
    %v202 = vld [vmem:[#allocation5 + $0x108] sm:$0xff]
    %v203 = vld [vmem:[#allocation5 + $0x110] sm:$0xff]
    %v204 = vld [vmem:[#allocation5 + $0x118] sm:$0xff]
    %v205 = vld [vmem:[#allocation5 + $0x120] sm:$0xff]
    %v206 = vld [vmem:[#allocation5 + $0x128] sm:$0xff]
    %v207 = vld [vmem:[#allocation5 + $0x130] sm:$0xff]
    %v208 = vld [vmem:[#allocation5 + $0x138] sm:$0xff]
    %v209 = vld [vmem:[#allocation5 + $0x140] sm:$0xff]
    %v210 = vld [vmem:[#allocation5 + $0x148] sm:$0xff]
    %v211 = vld [vmem:[#allocation5 + $0x150] sm:$0xff]
    %v212 = vld [vmem:[#allocation5 + $0x158] sm:$0xff]
    %v213 = vld [vmem:[#allocation5 + $0x160] sm:$0xff]
    %v214 = vld [vmem:[#allocation5 + $0x168] sm:$0xff]
    %v215 = vld [vmem:[#allocation5 + $0x170] sm:$0xff]
    %v216 = vld [vmem:[#allocation5 + $0x178] sm:$0xff]
    %v217 = vld [vmem:[#allocation5 + $0x180] sm:$0xff]
    %v218 = vld [vmem:[#allocation5 + $0x188] sm:$0xff]
    %v219 = vld [vmem:[#allocation5 + $0x190] sm:$0xff]
    %v220 = vld [vmem:[#allocation5 + $0x198] sm:$0xff]
    %v221 = vld [vmem:[#allocation5 + $0x1a0] sm:$0xff]
    %v222 = vld [vmem:[#allocation5 + $0x1a8] sm:$0xff]
    %v223 = vld [vmem:[#allocation5 + $0x1b0] sm:$0xff]
    %v224 = vld [vmem:[#allocation5 + $0x1b8] sm:$0xff]
    %v225 = vld [vmem:[#allocation5 + $0x1c0] sm:$0xff]
    %v226 = vld [vmem:[#allocation5 + $0x1c8] sm:$0xff]
    %v227 = vld [vmem:[#allocation5 + $0x1d0] sm:$0xff]
    %v228 = vld [vmem:[#allocation5 + $0x1d8] sm:$0xff]
    %v229 = vld [vmem:[#allocation5 + $0x1e0] sm:$0xff]
    %v230 = vld [vmem:[#allocation5 + $0x1e8] sm:$0xff]
    %v231 = vld [vmem:[#allocation5 + $0x1f0] sm:$0xff]
    %v232 = vld [vmem:[#allocation5 + $0x1f8] sm:$0xff]
    %v233 = vld [vmem:[#allocation5 + $0x200] sm:$0xff]
    %v234 = vld [vmem:[#allocation5 + $0x208] sm:$0xff]
    %v235 = vld [vmem:[#allocation5 + $0x210] sm:$0xff]
    %v236 = vld [vmem:[#allocation5 + $0x218] sm:$0xff]
    %v237 = vld [vmem:[#allocation5 + $0x220] sm:$0xff]
    %v238 = vld [vmem:[#allocation5 + $0x228] sm:$0xff]
    %v239 = vld [vmem:[#allocation5 + $0x230] sm:$0xff]
    %v240 = vld [vmem:[#allocation5 + $0x238] sm:$0xff]
    %v241 = vld [vmem:[#allocation5 + $0x240] sm:$0xff]
    %v242 = vld [vmem:[#allocation5 + $0x248] sm:$0xff]
    %v243 = vld [vmem:[#allocation5 + $0x250] sm:$0xff]
    %v244 = vld [vmem:[#allocation5 + $0x258] sm:$0xff]
    %v245 = vld [vmem:[#allocation5 + $0x260] sm:$0xff]
    %v246 = vld [vmem:[#allocation5 + $0x268] sm:$0xff]
    %v247 = vld [vmem:[#allocation5 + $0x270] sm:$0xff]
    %v248 = vld [vmem:[#allocation5 + $0x278] sm:$0xff]
    %v249 = vld [vmem:[#allocation5 + $0x280] sm:$0xff]
    %v250 = vld [vmem:[#allocation5 + $0x288] sm:$0xff]
    %v251 = vld [vmem:[#allocation5 + $0x290] sm:$0xff]
    %v252 = vld [vmem:[#allocation5 + $0x298] sm:$0xff]
    %v253 = vld [vmem:[#allocation5 + $0x2a0] sm:$0xff]
    %v254 = vld [vmem:[#allocation5 + $0x2a8] sm:$0xff]
    %v255 = vld [vmem:[#allocation5 + $0x2b0] sm:$0xff]
    %v256 = vld [vmem:[#allocation5 + $0x2b8] sm:$0xff]
    %v257 = vld [vmem:[#allocation5 + $0x2c0] sm:$0xff]
    %v258 = vld [vmem:[#allocation5 + $0x2c8] sm:$0xff]
    %v259 = vld [vmem:[#allocation5 + $0x2d0] sm:$0xff]
    %v260 = vld [vmem:[#allocation5 + $0x2d8] sm:$0xff]
    %v261 = vld [vmem:[#allocation5 + $0x2e0] sm:$0xff]
    %v262 = vld [vmem:[#allocation5 + $0x2e8] sm:$0xff]
    %v263 = vld [vmem:[#allocation5 + $0x2f0] sm:$0xff]
    %v264 = vld [vmem:[#allocation5 + $0x2f8] sm:$0xff]
    %v265 = vld [vmem:[#allocation5 + $0x300] sm:$0xff]
    %v266 = vld [vmem:[#allocation5 + $0x308] sm:$0xff]
    %v267 = vld [vmem:[#allocation5 + $0x310] sm:$0xff]
    %v268 = vld [vmem:[#allocation5 + $0x318] sm:$0xff]
    %v269 = vld [vmem:[#allocation5 + $0x320] sm:$0xff]
    %v270 = vld [vmem:[#allocation5 + $0x328] sm:$0xff]
    %v271 = vld [vmem:[#allocation5 + $0x330] sm:$0xff]
    %v272 = vld [vmem:[#allocation5 + $0x338] sm:$0xff]
    %v273 = vld [vmem:[#allocation5 + $0x340] sm:$0xff]
    %v274 = vld [vmem:[#allocation5 + $0x348] sm:$0xff]
    %v275 = vld [vmem:[#allocation5 + $0x350] sm:$0xff]
    %v276 = vld [vmem:[#allocation5 + $0x358] sm:$0xff]
    %v277 = vld [vmem:[#allocation5 + $0x360] sm:$0xff]
    %v278 = vld [vmem:[#allocation5 + $0x368] sm:$0xff]
    %v279 = vld [vmem:[#allocation5 + $0x370] sm:$0xff]
    %v280 = vld [vmem:[#allocation5 + $0x378] sm:$0xff]
    %v281 = vld [vmem:[#allocation5 + $0x380] sm:$0xff]
    %v282 = vld [vmem:[#allocation5 + $0x388] sm:$0xff]
    %v283 = vld [vmem:[#allocation5 + $0x390] sm:$0xff]
    %v284 = vld [vmem:[#allocation5 + $0x398] sm:$0xff]
    %v285 = vld [vmem:[#allocation5 + $0x3a0] sm:$0xff]
    %v286 = vld [vmem:[#allocation5 + $0x3a8] sm:$0xff]
    %v287 = vld [vmem:[#allocation5 + $0x3b0] sm:$0xff]
    %v288 = vld [vmem:[#allocation5 + $0x3b8] sm:$0xff]
    %v289 = vld [vmem:[#allocation5 + $0x3c0] sm:$0xff]
    %v290 = vld [vmem:[#allocation5 + $0x3c8] sm:$0xff]
    %v291 = vld [vmem:[#allocation5 + $0x3d0] sm:$0xff]
    %v292 = vld [vmem:[#allocation5 + $0x3d8] sm:$0xff]
    %v293 = vld [vmem:[#allocation5 + $0x3e0] sm:$0xff]
    %v294 = vld [vmem:[#allocation5 + $0x3e8] sm:$0xff]
    %v295 = vld [vmem:[#allocation5 + $0x3f0] sm:$0xff]
    %v296 = vld [vmem:[#allocation5 + $0x3f8] sm:$0xff]
    %v297 = vld [vmem:[#allocation5 + $0x400] sm:$0xff]
    %v298 = vld [vmem:[#allocation5 + $0x408] sm:$0xff]
    %v299 = vld [vmem:[#allocation5 + $0x410] sm:$0xff]
    %v300 = vld [vmem:[#allocation5 + $0x418] sm:$0xff]
    %v301 = vld [vmem:[#allocation5 + $0x420] sm:$0xff]
    %v302 = vld [vmem:[#allocation5 + $0x428] sm:$0xff]
    %v303 = vld [vmem:[#allocation5 + $0x430] sm:$0xff]
    %v304 = vld [vmem:[#allocation5 + $0x438] sm:$0xff]
    %v305 = vld [vmem:[#allocation5 + $0x440] sm:$0xff]
    %v306 = vld [vmem:[#allocation5 + $0x448] sm:$0xff]
    %v307 = vld [vmem:[#allocation5 + $0x450] sm:$0xff]
    %v308 = vld [vmem:[#allocation5 + $0x458] sm:$0xff]
    %v309 = vld [vmem:[#allocation5 + $0x460] sm:$0xff]
    %v310 = vld [vmem:[#allocation5 + $0x468] sm:$0xff]
    %v311 = vld [vmem:[#allocation5 + $0x470] sm:$0xff]
    %v312 = vld [vmem:[#allocation5 + $0x478] sm:$0xff]
    %v313 = vld [vmem:[#allocation5 + $0x480] sm:$0xff]
    %v314 = vld [vmem:[#allocation5 + $0x488] sm:$0xff]
    %v315 = vld [vmem:[#allocation5 + $0x490] sm:$0xff]
    %v316 = vld [vmem:[#allocation5 + $0x498] sm:$0xff]
    %v317 = vld [vmem:[#allocation5 + $0x4a0] sm:$0xff]
    %v318 = vld [vmem:[#allocation5 + $0x4a8] sm:$0xff]
    %v319 = vld [vmem:[#allocation5 + $0x4b0] sm:$0xff]
    %v320 = vld [vmem:[#allocation5 + $0x4b8] sm:$0xff]
    %v321 = vld [vmem:[#allocation5 + $0x4c0] sm:$0xff]
    %v322 = vld [vmem:[#allocation5 + $0x4c8] sm:$0xff]
    %v323 = vld [vmem:[#allocation5 + $0x4d0] sm:$0xff]
    %v324 = vld [vmem:[#allocation5 + $0x4d8] sm:$0xff]
    %v325 = vld [vmem:[#allocation5 + $0x4e0] sm:$0xff]
    %v326 = vld [vmem:[#allocation5 + $0x4e8] sm:$0xff]
    %v327 = vld [vmem:[#allocation5 + $0x4f0] sm:$0xff]
    %v328 = vld [vmem:[#allocation5 + $0x4f8] sm:$0xff]
    %v329 = vld [vmem:[#allocation5 + $0x500] sm:$0xff]
    %v330 = vld [vmem:[#allocation5 + $0x508] sm:$0xff]
    %v331 = vld [vmem:[#allocation5 + $0x510] sm:$0xff]
    %v332 = vld [vmem:[#allocation5 + $0x518] sm:$0xff]
    %v333 = vld [vmem:[#allocation5 + $0x520] sm:$0xff]
    %v334 = vld [vmem:[#allocation5 + $0x528] sm:$0xff]
    %v335 = vld [vmem:[#allocation5 + $0x530] sm:$0xff]
    %v336 = vld [vmem:[#allocation5 + $0x538] sm:$0xff]
    %v337 = vld [vmem:[#allocation5 + $0x540] sm:$0xff]
    %v338 = vld [vmem:[#allocation5 + $0x548] sm:$0xff]
    %v339 = vld [vmem:[#allocation5 + $0x550] sm:$0xff]
    %v340 = vld [vmem:[#allocation5 + $0x558] sm:$0xff]
    %v341 = vld [vmem:[#allocation5 + $0x560] sm:$0xff]
    %v342 = vld [vmem:[#allocation5 + $0x568] sm:$0xff]
    %v343 = vld [vmem:[#allocation5 + $0x570] sm:$0xff]
    %v344 = vld [vmem:[#allocation5 + $0x578] sm:$0xff]
    %v345 = vld [vmem:[#allocation5 + $0x580] sm:$0xff]
    %v346 = vld [vmem:[#allocation5 + $0x588] sm:$0xff]
    %v347 = vld [vmem:[#allocation5 + $0x590] sm:$0xff]
    %v348 = vld [vmem:[#allocation5 + $0x598] sm:$0xff]
    %v349 = vld [vmem:[#allocation5 + $0x5a0] sm:$0xff]
    %v350 = vld [vmem:[#allocation5 + $0x5a8] sm:$0xff]
    %v351 = vld [vmem:[#allocation5 + $0x5b0] sm:$0xff]
    %v352 = vld [vmem:[#allocation5 + $0x5b8] sm:$0xff]
    %v353 = vld [vmem:[#allocation5 + $0x5c0] sm:$0xff]
    %v354 = vld [vmem:[#allocation5 + $0x5c8] sm:$0xff]
    %v355 = vld [vmem:[#allocation5 + $0x5d0] sm:$0xff]
    %v356 = vld [vmem:[#allocation5 + $0x5d8] sm:$0xff]
    %v357 = vld [vmem:[#allocation5 + $0x5e0] sm:$0xff]
    %v358 = vld [vmem:[#allocation5 + $0x5e8] sm:$0xff]
    %v359 = vld [vmem:[#allocation5 + $0x5f0] sm:$0xff]
    %v360 = vld [vmem:[#allocation5 + $0x5f8] sm:$0xff]
    %v361 = vld [vmem:[#allocation5 + $0x600] sm:$0xff]
    %v362 = vld [vmem:[#allocation5 + $0x608] sm:$0xff]
    %v363 = vld [vmem:[#allocation5 + $0x610] sm:$0xff]
    %v364 = vld [vmem:[#allocation5 + $0x618] sm:$0xff]
    %v365 = vld [vmem:[#allocation7] sm:$0xf]
    %v367 = vlaneseq
    %v368 = vshrl.u32 %v367, 7
    %v369 = vsub.s32 0, %v368
    %v370 = vrot.slane %v365, %v369
    %v371 = vlaneseq
    %v372 = vshrl.u32 %v371, 7
    %v373 = vsub.s32 1, %v372
    %v374 = vrot.slane %v365, %v373
    %v375 = vlaneseq
    %v376 = vshrl.u32 %v375, 7
    %v377 = vsub.s32 2, %v376
    %v378 = vrot.slane %v365, %v377
    %v379 = vlaneseq
    %v380 = vshrl.u32 %v379, 7
    %v381 = vsub.s32 3, %v380
    %v382 = vrot.slane %v365, %v381
    %v583 = vunpack.c.l.b16 %v169
    %v584 = vunpack.c.h.b16 %v169
    %v585 = vunpack.c.l.b16 %v170
    %v586 = vunpack.c.h.b16 %v170
    %v587 = vunpack.c.l.b16 %v171
    %v588 = vunpack.c.h.b16 %v171
    %v589 = vunpack.c.l.b16 %v172
    %v590 = vunpack.c.h.b16 %v172
    %v591 = vunpack.c.l.b16 %v173
    %v592 = vunpack.c.h.b16 %v173
    %v593 = vunpack.c.l.b16 %v174
    %v594 = vunpack.c.h.b16 %v174
    %v595 = vunpack.c.l.b16 %v175
    %v596 = vunpack.c.h.b16 %v175
    %v597 = vunpack.c.l.b16 %v176
    %v598 = vunpack.c.h.b16 %v176
    %v599 = vunpack.c.l.b16 %v177
    %v600 = vunpack.c.h.b16 %v177
    %v601 = vunpack.c.l.b16 %v178
    %v602 = vunpack.c.h.b16 %v178
    %v603 = vunpack.c.l.b16 %v179
    %v604 = vunpack.c.h.b16 %v179
    %v605 = vunpack.c.l.b16 %v180
    %v606 = vunpack.c.h.b16 %v180
    %v607 = vunpack.c.l.b16 %v181
    %v608 = vunpack.c.h.b16 %v181
    %v609 = vunpack.c.l.b16 %v182
    %v610 = vunpack.c.h.b16 %v182
    %v611 = vunpack.c.l.b16 %v183
    %v612 = vunpack.c.h.b16 %v183
    %v613 = vunpack.c.l.b16 %v184
    %v614 = vunpack.c.h.b16 %v184
    %v615 = vunpack.c.l.b16 %v185
    %v616 = vunpack.c.h.b16 %v185
    %v617 = vunpack.c.l.b16 %v186
    %v618 = vunpack.c.h.b16 %v186
    %v619 = vunpack.c.l.b16 %v187
    %v620 = vunpack.c.h.b16 %v187
    %v621 = vunpack.c.l.b16 %v188
    %v622 = vunpack.c.h.b16 %v188
    %v623 = vunpack.c.l.b16 %v189
    %v624 = vunpack.c.h.b16 %v189
    %v625 = vunpack.c.l.b16 %v190
    %v626 = vunpack.c.h.b16 %v190
    %v627 = vunpack.c.l.b16 %v191
    %v628 = vunpack.c.h.b16 %v191
    %v629 = vunpack.c.l.b16 %v192
    %v630 = vunpack.c.h.b16 %v192
    %v631 = vunpack.c.l.b16 %v193
    %v632 = vunpack.c.h.b16 %v193
    %v633 = vunpack.c.l.b16 %v194
    %v634 = vunpack.c.h.b16 %v194
    %v635 = vunpack.c.l.b16 %v195
    %v636 = vunpack.c.h.b16 %v195
    %v637 = vunpack.c.l.b16 %v196
    %v638 = vunpack.c.h.b16 %v196
    %v639 = vunpack.c.l.b16 %v197
    %v640 = vunpack.c.h.b16 %v197
    %v641 = vunpack.c.l.b16 %v198
    %v642 = vunpack.c.h.b16 %v198
    %v643 = vunpack.c.l.b16 %v199
    %v644 = vunpack.c.h.b16 %v199
    %v645 = vunpack.c.l.b16 %v200
    %v646 = vunpack.c.h.b16 %v200
    %v647 = vunpack.c.l.b16 %v201
    %v648 = vunpack.c.h.b16 %v201
    %v649 = vunpack.c.l.b16 %v202
    %v650 = vunpack.c.h.b16 %v202
    %v651 = vunpack.c.l.b16 %v203
    %v652 = vunpack.c.h.b16 %v203
    %v653 = vunpack.c.l.b16 %v204
    %v654 = vunpack.c.h.b16 %v204
    %v655 = vunpack.c.l.b16 %v205
    %v656 = vunpack.c.h.b16 %v205
    %v657 = vunpack.c.l.b16 %v206
    %v658 = vunpack.c.h.b16 %v206
    %v659 = vunpack.c.l.b16 %v207
    %v660 = vunpack.c.h.b16 %v207
    %v661 = vunpack.c.l.b16 %v208
    %v662 = vunpack.c.h.b16 %v208
    %v663 = vunpack.c.l.b16 %v209
    %v664 = vunpack.c.h.b16 %v209
    %v665 = vunpack.c.l.b16 %v210
    %v666 = vunpack.c.h.b16 %v210
    %v667 = vunpack.c.l.b16 %v211
    %v668 = vunpack.c.h.b16 %v211
    %v669 = vunpack.c.l.b16 %v212
    %v670 = vunpack.c.h.b16 %v212
    %v671 = vunpack.c.l.b16 %v213
    %v672 = vunpack.c.h.b16 %v213
    %v673 = vunpack.c.l.b16 %v214
    %v674 = vunpack.c.h.b16 %v214
    %v675 = vunpack.c.l.b16 %v215
    %v676 = vunpack.c.h.b16 %v215
    %v677 = vunpack.c.l.b16 %v216
    %v678 = vunpack.c.h.b16 %v216
    %v679 = vunpack.c.l.b16 %v217
    %v680 = vunpack.c.h.b16 %v217
    %v681 = vunpack.c.l.b16 %v218
    %v682 = vunpack.c.h.b16 %v218
    %v683 = vunpack.c.l.b16 %v219
    %v684 = vunpack.c.h.b16 %v219
    %v685 = vunpack.c.l.b16 %v220
    %v686 = vunpack.c.h.b16 %v220
    %v687 = vunpack.c.l.b16 %v221
    %v688 = vunpack.c.h.b16 %v221
    %v689 = vunpack.c.l.b16 %v222
    %v690 = vunpack.c.h.b16 %v222
    %v691 = vunpack.c.l.b16 %v223
    %v692 = vunpack.c.h.b16 %v223
    %v693 = vunpack.c.l.b16 %v224
    %v694 = vunpack.c.h.b16 %v224
    %v695 = vunpack.c.l.b16 %v225
    %v696 = vunpack.c.h.b16 %v225
    %v697 = vunpack.c.l.b16 %v226
    %v698 = vunpack.c.h.b16 %v226
    %v699 = vunpack.c.l.b16 %v227
    %v700 = vunpack.c.h.b16 %v227
    %v701 = vunpack.c.l.b16 %v228
    %v702 = vunpack.c.h.b16 %v228
    %v703 = vunpack.c.l.b16 %v229
    %v704 = vunpack.c.h.b16 %v229
    %v705 = vunpack.c.l.b16 %v230
    %v706 = vunpack.c.h.b16 %v230
    %v707 = vunpack.c.l.b16 %v231
    %v708 = vunpack.c.h.b16 %v231
    %v709 = vunpack.c.l.b16 %v232
    %v710 = vunpack.c.h.b16 %v232
    %v711 = vunpack.c.l.b16 %v233
    %v712 = vunpack.c.h.b16 %v233
    %v713 = vunpack.c.l.b16 %v234
    %v714 = vunpack.c.h.b16 %v234
    %v715 = vunpack.c.l.b16 %v235
    %v716 = vunpack.c.h.b16 %v235
    %v717 = vunpack.c.l.b16 %v236
    %v718 = vunpack.c.h.b16 %v236
    %v719 = vunpack.c.l.b16 %v237
    %v720 = vunpack.c.h.b16 %v237
    %v721 = vunpack.c.l.b16 %v238
    %v722 = vunpack.c.h.b16 %v238
    %v723 = vunpack.c.l.b16 %v239
    %v724 = vunpack.c.h.b16 %v239
    %v725 = vunpack.c.l.b16 %v240
    %v726 = vunpack.c.h.b16 %v240
    %v727 = vunpack.c.l.b16 %v241
    %v728 = vunpack.c.h.b16 %v241
    %v729 = vunpack.c.l.b16 %v242
    %v730 = vunpack.c.h.b16 %v242
    %v731 = vunpack.c.l.b16 %v243
    %v732 = vunpack.c.h.b16 %v243
    %v733 = vunpack.c.l.b16 %v244
    %v734 = vunpack.c.h.b16 %v244
    %v735 = vunpack.c.l.b16 %v245
    %v736 = vunpack.c.h.b16 %v245
    %v737 = vunpack.c.l.b16 %v246
    %v738 = vunpack.c.h.b16 %v246
    %v739 = vunpack.c.l.b16 %v247
    %v740 = vunpack.c.h.b16 %v247
    %v741 = vunpack.c.l.b16 %v248
    %v742 = vunpack.c.h.b16 %v248
    %v743 = vunpack.c.l.b16 %v249
    %v744 = vunpack.c.h.b16 %v249
    %v745 = vunpack.c.l.b16 %v250
    %v746 = vunpack.c.h.b16 %v250
    %v747 = vunpack.c.l.b16 %v251
    %v748 = vunpack.c.h.b16 %v251
    %v749 = vunpack.c.l.b16 %v252
    %v750 = vunpack.c.h.b16 %v252
    %v751 = vunpack.c.l.b16 %v253
    %v752 = vunpack.c.h.b16 %v253
    %v753 = vunpack.c.l.b16 %v254
    %v754 = vunpack.c.h.b16 %v254
    %v755 = vunpack.c.l.b16 %v255
    %v756 = vunpack.c.h.b16 %v255
    %v757 = vunpack.c.l.b16 %v256
    %v758 = vunpack.c.h.b16 %v256
    %v759 = vunpack.c.l.b16 %v257
    %v760 = vunpack.c.h.b16 %v257
    %v761 = vunpack.c.l.b16 %v258
    %v762 = vunpack.c.h.b16 %v258
    %v763 = vunpack.c.l.b16 %v259
    %v764 = vunpack.c.h.b16 %v259
    %v765 = vunpack.c.l.b16 %v260
    %v766 = vunpack.c.h.b16 %v260
    %v767 = vunpack.c.l.b16 %v261
    %v768 = vunpack.c.h.b16 %v261
    %v769 = vunpack.c.l.b16 %v262
    %v770 = vunpack.c.h.b16 %v262
    %v771 = vunpack.c.l.b16 %v263
    %v772 = vunpack.c.h.b16 %v263
    %v773 = vunpack.c.l.b16 %v264
    %v774 = vunpack.c.h.b16 %v264
    %v775 = vunpack.c.l.b16 %v265
    %v776 = vunpack.c.h.b16 %v265
    %v777 = vunpack.c.l.b16 %v266
    %v778 = vunpack.c.h.b16 %v266
    %v779 = vunpack.c.l.b16 %v267
    %v780 = vunpack.c.h.b16 %v267
    %v781 = vunpack.c.l.b16 %v268
    %v782 = vunpack.c.h.b16 %v268
    %v783 = vunpack.c.l.b16 %v269
    %v784 = vunpack.c.h.b16 %v269
    %v785 = vunpack.c.l.b16 %v270
    %v786 = vunpack.c.h.b16 %v270
    %v787 = vunpack.c.l.b16 %v271
    %v788 = vunpack.c.h.b16 %v271
    %v789 = vunpack.c.l.b16 %v272
    %v790 = vunpack.c.h.b16 %v272
    %v791 = vunpack.c.l.b16 %v273
    %v792 = vunpack.c.h.b16 %v273
    %v793 = vunpack.c.l.b16 %v274
    %v794 = vunpack.c.h.b16 %v274
    %v795 = vunpack.c.l.b16 %v275
    %v796 = vunpack.c.h.b16 %v275
    %v797 = vunpack.c.l.b16 %v276
    %v798 = vunpack.c.h.b16 %v276
    %v799 = vunpack.c.l.b16 %v277
    %v800 = vunpack.c.h.b16 %v277
    %v801 = vunpack.c.l.b16 %v278
    %v802 = vunpack.c.h.b16 %v278
    %v803 = vunpack.c.l.b16 %v279
    %v804 = vunpack.c.h.b16 %v279
    %v805 = vunpack.c.l.b16 %v280
    %v806 = vunpack.c.h.b16 %v280
    %v807 = vunpack.c.l.b16 %v281
    %v808 = vunpack.c.h.b16 %v281
    %v809 = vunpack.c.l.b16 %v282
    %v810 = vunpack.c.h.b16 %v282
    %v811 = vunpack.c.l.b16 %v283
    %v812 = vunpack.c.h.b16 %v283
    %v813 = vunpack.c.l.b16 %v284
    %v814 = vunpack.c.h.b16 %v284
    %v815 = vunpack.c.l.b16 %v285
    %v816 = vunpack.c.h.b16 %v285
    %v817 = vunpack.c.l.b16 %v286
    %v818 = vunpack.c.h.b16 %v286
    %v819 = vunpack.c.l.b16 %v287
    %v820 = vunpack.c.h.b16 %v287
    %v821 = vunpack.c.l.b16 %v288
    %v822 = vunpack.c.h.b16 %v288
    %v823 = vunpack.c.l.b16 %v289
    %v824 = vunpack.c.h.b16 %v289
    %v825 = vunpack.c.l.b16 %v290
    %v826 = vunpack.c.h.b16 %v290
    %v827 = vunpack.c.l.b16 %v291
    %v828 = vunpack.c.h.b16 %v291
    %v829 = vunpack.c.l.b16 %v292
    %v830 = vunpack.c.h.b16 %v292
    %v831 = vunpack.c.l.b16 %v293
    %v832 = vunpack.c.h.b16 %v293
    %v833 = vunpack.c.l.b16 %v294
    %v834 = vunpack.c.h.b16 %v294
    %v835 = vunpack.c.l.b16 %v295
    %v836 = vunpack.c.h.b16 %v295
    %v837 = vunpack.c.l.b16 %v296
    %v838 = vunpack.c.h.b16 %v296
    %v839 = vunpack.c.l.b16 %v297
    %v840 = vunpack.c.h.b16 %v297
    %v841 = vunpack.c.l.b16 %v298
    %v842 = vunpack.c.h.b16 %v298
    %v843 = vunpack.c.l.b16 %v299
    %v844 = vunpack.c.h.b16 %v299
    %v845 = vunpack.c.l.b16 %v300
    %v846 = vunpack.c.h.b16 %v300
    %v847 = vunpack.c.l.b16 %v301
    %v848 = vunpack.c.h.b16 %v301
    %v849 = vunpack.c.l.b16 %v302
    %v850 = vunpack.c.h.b16 %v302
    %v851 = vunpack.c.l.b16 %v303
    %v852 = vunpack.c.h.b16 %v303
    %v853 = vunpack.c.l.b16 %v304
    %v854 = vunpack.c.h.b16 %v304
    %v855 = vunpack.c.l.b16 %v305
    %v856 = vunpack.c.h.b16 %v305
    %v857 = vunpack.c.l.b16 %v306
    %v858 = vunpack.c.h.b16 %v306
    %v859 = vunpack.c.l.b16 %v307
    %v860 = vunpack.c.h.b16 %v307
    %v861 = vunpack.c.l.b16 %v308
    %v862 = vunpack.c.h.b16 %v308
    %v863 = vunpack.c.l.b16 %v309
    %v864 = vunpack.c.h.b16 %v309
    %v865 = vunpack.c.l.b16 %v310
    %v866 = vunpack.c.h.b16 %v310
    %v867 = vunpack.c.l.b16 %v311
    %v868 = vunpack.c.h.b16 %v311
    %v869 = vunpack.c.l.b16 %v312
    %v870 = vunpack.c.h.b16 %v312
    %v871 = vunpack.c.l.b16 %v313
    %v872 = vunpack.c.h.b16 %v313
    %v873 = vunpack.c.l.b16 %v314
    %v874 = vunpack.c.h.b16 %v314
    %v875 = vunpack.c.l.b16 %v315
    %v876 = vunpack.c.h.b16 %v315
    %v877 = vunpack.c.l.b16 %v316
    %v878 = vunpack.c.h.b16 %v316
    %v879 = vunpack.c.l.b16 %v317
    %v880 = vunpack.c.h.b16 %v317
    %v881 = vunpack.c.l.b16 %v318
    %v882 = vunpack.c.h.b16 %v318
    %v883 = vunpack.c.l.b16 %v319
    %v884 = vunpack.c.h.b16 %v319
    %v885 = vunpack.c.l.b16 %v320
    %v886 = vunpack.c.h.b16 %v320
    %v887 = vunpack.c.l.b16 %v321
    %v888 = vunpack.c.h.b16 %v321
    %v889 = vunpack.c.l.b16 %v322
    %v890 = vunpack.c.h.b16 %v322
    %v891 = vunpack.c.l.b16 %v323
    %v892 = vunpack.c.h.b16 %v323
    %v893 = vunpack.c.l.b16 %v324
    %v894 = vunpack.c.h.b16 %v324
    %v895 = vunpack.c.l.b16 %v325
    %v896 = vunpack.c.h.b16 %v325
    %v897 = vunpack.c.l.b16 %v326
    %v898 = vunpack.c.h.b16 %v326
    %v899 = vunpack.c.l.b16 %v327
    %v900 = vunpack.c.h.b16 %v327
    %v901 = vunpack.c.l.b16 %v328
    %v902 = vunpack.c.h.b16 %v328
    %v903 = vunpack.c.l.b16 %v329
    %v904 = vunpack.c.h.b16 %v329
    %v905 = vunpack.c.l.b16 %v330
    %v906 = vunpack.c.h.b16 %v330
    %v907 = vunpack.c.l.b16 %v331
    %v908 = vunpack.c.h.b16 %v331
    %v909 = vunpack.c.l.b16 %v332
    %v910 = vunpack.c.h.b16 %v332
    %v911 = vunpack.c.l.b16 %v333
    %v912 = vunpack.c.h.b16 %v333
    %v913 = vunpack.c.l.b16 %v334
    %v914 = vunpack.c.h.b16 %v334
    %v915 = vunpack.c.l.b16 %v335
    %v916 = vunpack.c.h.b16 %v335
    %v917 = vunpack.c.l.b16 %v336
    %v918 = vunpack.c.h.b16 %v336
    %v919 = vunpack.c.l.b16 %v337
    %v920 = vunpack.c.h.b16 %v337
    %v921 = vunpack.c.l.b16 %v338
    %v922 = vunpack.c.h.b16 %v338
    %v923 = vunpack.c.l.b16 %v339
    %v924 = vunpack.c.h.b16 %v339
    %v925 = vunpack.c.l.b16 %v340
    %v926 = vunpack.c.h.b16 %v340
    %v927 = vunpack.c.l.b16 %v341
    %v928 = vunpack.c.h.b16 %v341
    %v929 = vunpack.c.l.b16 %v342
    %v930 = vunpack.c.h.b16 %v342
    %v931 = vunpack.c.l.b16 %v343
    %v932 = vunpack.c.h.b16 %v343
    %v933 = vunpack.c.l.b16 %v344
    %v934 = vunpack.c.h.b16 %v344
    %v935 = vunpack.c.l.b16 %v345
    %v936 = vunpack.c.h.b16 %v345
    %v937 = vunpack.c.l.b16 %v346
    %v938 = vunpack.c.h.b16 %v346
    %v939 = vunpack.c.l.b16 %v347
    %v940 = vunpack.c.h.b16 %v347
    %v941 = vunpack.c.l.b16 %v348
    %v942 = vunpack.c.h.b16 %v348
    %v943 = vunpack.c.l.b16 %v349
    %v944 = vunpack.c.h.b16 %v349
    %v945 = vunpack.c.l.b16 %v350
    %v946 = vunpack.c.h.b16 %v350
    %v947 = vunpack.c.l.b16 %v351
    %v948 = vunpack.c.h.b16 %v351
    %v949 = vunpack.c.l.b16 %v352
    %v950 = vunpack.c.h.b16 %v352
    %v951 = vunpack.c.l.b16 %v353
    %v952 = vunpack.c.h.b16 %v353
    %v953 = vunpack.c.l.b16 %v354
    %v954 = vunpack.c.h.b16 %v354
    %v955 = vunpack.c.l.b16 %v355
    %v956 = vunpack.c.h.b16 %v355
    %v957 = vunpack.c.l.b16 %v356
    %v958 = vunpack.c.h.b16 %v356
    %v959 = vunpack.c.l.b16 %v357
    %v960 = vunpack.c.h.b16 %v357
    %v961 = vunpack.c.l.b16 %v358
    %v962 = vunpack.c.h.b16 %v358
    %v963 = vunpack.c.l.b16 %v359
    %v964 = vunpack.c.h.b16 %v359
    %v965 = vunpack.c.l.b16 %v360
    %v966 = vunpack.c.h.b16 %v360
    %v967 = vunpack.c.l.b16 %v361
    %v968 = vunpack.c.h.b16 %v361
    %v969 = vunpack.c.l.b16 %v362
    %v970 = vunpack.c.h.b16 %v362
    %v971 = vunpack.c.l.b16 %v363
    %v972 = vunpack.c.h.b16 %v363
    %v973 = vunpack.c.l.b16 %v364
    %v974 = vunpack.c.h.b16 %v364
    %v975 = vpack.c.b16 %v587, %v583
    %v976 = vpack.c.b16 %v588, %v584
    %v977 = vpack.c.b16 %v589, %v585
    %v978 = vpack.c.b16 %v590, %v586
    %v979 = vpack.c.b16 %v595, %v591
    %v980 = vpack.c.b16 %v596, %v592
    %v981 = vpack.c.b16 %v597, %v593
    %v982 = vpack.c.b16 %v598, %v594
    %v983 = vpack.c.b16 %v603, %v599
    %v984 = vpack.c.b16 %v604, %v600
    %v985 = vpack.c.b16 %v605, %v601
    %v986 = vpack.c.b16 %v606, %v602
    %v987 = vpack.c.b16 %v611, %v607
    %v988 = vpack.c.b16 %v612, %v608
    %v989 = vpack.c.b16 %v613, %v609
    %v990 = vpack.c.b16 %v614, %v610
    %v991 = vpack.c.b16 %v619, %v615
    %v992 = vpack.c.b16 %v620, %v616
    %v993 = vpack.c.b16 %v621, %v617
    %v994 = vpack.c.b16 %v622, %v618
    %v995 = vpack.c.b16 %v627, %v623
    %v996 = vpack.c.b16 %v628, %v624
    %v997 = vpack.c.b16 %v629, %v625
    %v998 = vpack.c.b16 %v630, %v626
    %v999 = vpack.c.b16 %v635, %v631
    %v1000 = vpack.c.b16 %v636, %v632
    %v1001 = vpack.c.b16 %v637, %v633
    %v1002 = vpack.c.b16 %v638, %v634
    %v1003 = vpack.c.b16 %v643, %v639
    %v1004 = vpack.c.b16 %v644, %v640
    %v1005 = vpack.c.b16 %v645, %v641
    %v1006 = vpack.c.b16 %v646, %v642
    %v1007 = vpack.c.b16 %v651, %v647
    %v1008 = vpack.c.b16 %v652, %v648
    %v1009 = vpack.c.b16 %v653, %v649
    %v1010 = vpack.c.b16 %v654, %v650
    %v1011 = vpack.c.b16 %v659, %v655
    %v1012 = vpack.c.b16 %v660, %v656
    %v1013 = vpack.c.b16 %v661, %v657
    %v1014 = vpack.c.b16 %v662, %v658
    %v1015 = vpack.c.b16 %v667, %v663
    %v1016 = vpack.c.b16 %v668, %v664
    %v1017 = vpack.c.b16 %v669, %v665
    %v1018 = vpack.c.b16 %v670, %v666
    %v1019 = vpack.c.b16 %v675, %v671
    %v1020 = vpack.c.b16 %v676, %v672
    %v1021 = vpack.c.b16 %v677, %v673
    %v1022 = vpack.c.b16 %v678, %v674
    %v1023 = vpack.c.b16 %v683, %v679
    %v1024 = vpack.c.b16 %v684, %v680
    %v1025 = vpack.c.b16 %v685, %v681
    %v1026 = vpack.c.b16 %v686, %v682
    %v1027 = vpack.c.b16 %v691, %v687
    %v1028 = vpack.c.b16 %v692, %v688
    %v1029 = vpack.c.b16 %v693, %v689
    %v1030 = vpack.c.b16 %v694, %v690
    %v1031 = vpack.c.b16 %v699, %v695
    %v1032 = vpack.c.b16 %v700, %v696
    %v1033 = vpack.c.b16 %v701, %v697
    %v1034 = vpack.c.b16 %v702, %v698
    %v1035 = vpack.c.b16 %v707, %v703
    %v1036 = vpack.c.b16 %v708, %v704
    %v1037 = vpack.c.b16 %v709, %v705
    %v1038 = vpack.c.b16 %v710, %v706
    %v1039 = vpack.c.b16 %v715, %v711
    %v1040 = vpack.c.b16 %v716, %v712
    %v1041 = vpack.c.b16 %v717, %v713
    %v1042 = vpack.c.b16 %v718, %v714
    %v1043 = vpack.c.b16 %v723, %v719
    %v1044 = vpack.c.b16 %v724, %v720
    %v1045 = vpack.c.b16 %v725, %v721
    %v1046 = vpack.c.b16 %v726, %v722
    %v1047 = vpack.c.b16 %v731, %v727
    %v1048 = vpack.c.b16 %v732, %v728
    %v1049 = vpack.c.b16 %v733, %v729
    %v1050 = vpack.c.b16 %v734, %v730
    %v1051 = vpack.c.b16 %v739, %v735
    %v1052 = vpack.c.b16 %v740, %v736
    %v1053 = vpack.c.b16 %v741, %v737
    %v1054 = vpack.c.b16 %v742, %v738
    %v1055 = vpack.c.b16 %v747, %v743
    %v1056 = vpack.c.b16 %v748, %v744
    %v1057 = vpack.c.b16 %v749, %v745
    %v1058 = vpack.c.b16 %v750, %v746
    %v1059 = vpack.c.b16 %v755, %v751
    %v1060 = vpack.c.b16 %v756, %v752
    %v1061 = vpack.c.b16 %v757, %v753
    %v1062 = vpack.c.b16 %v758, %v754
    %v1063 = vpack.c.b16 %v763, %v759
    %v1064 = vpack.c.b16 %v764, %v760
    %v1065 = vpack.c.b16 %v765, %v761
    %v1066 = vpack.c.b16 %v766, %v762
    %v1067 = vpack.c.b16 %v771, %v767
    %v1068 = vpack.c.b16 %v772, %v768
    %v1069 = vpack.c.b16 %v773, %v769
    %v1070 = vpack.c.b16 %v774, %v770
    %v1071 = vpack.c.b16 %v779, %v775
    %v1072 = vpack.c.b16 %v780, %v776
    %v1073 = vpack.c.b16 %v781, %v777
    %v1074 = vpack.c.b16 %v782, %v778
    %v1075 = vpack.c.b16 %v787, %v783
    %v1076 = vpack.c.b16 %v788, %v784
    %v1077 = vpack.c.b16 %v789, %v785
    %v1078 = vpack.c.b16 %v790, %v786
    %v1079 = vpack.c.b16 %v795, %v791
    %v1080 = vpack.c.b16 %v796, %v792
    %v1081 = vpack.c.b16 %v797, %v793
    %v1082 = vpack.c.b16 %v798, %v794
    %v1083 = vpack.c.b16 %v803, %v799
    %v1084 = vpack.c.b16 %v804, %v800
    %v1085 = vpack.c.b16 %v805, %v801
    %v1086 = vpack.c.b16 %v806, %v802
    %v1087 = vpack.c.b16 %v811, %v807
    %v1088 = vpack.c.b16 %v812, %v808
    %v1089 = vpack.c.b16 %v813, %v809
    %v1090 = vpack.c.b16 %v814, %v810
    %v1091 = vpack.c.b16 %v819, %v815
    %v1092 = vpack.c.b16 %v820, %v816
    %v1093 = vpack.c.b16 %v821, %v817
    %v1094 = vpack.c.b16 %v822, %v818
    %v1095 = vpack.c.b16 %v827, %v823
    %v1096 = vpack.c.b16 %v828, %v824
    %v1097 = vpack.c.b16 %v829, %v825
    %v1098 = vpack.c.b16 %v830, %v826
    %v1099 = vpack.c.b16 %v835, %v831
    %v1100 = vpack.c.b16 %v836, %v832
    %v1101 = vpack.c.b16 %v837, %v833
    %v1102 = vpack.c.b16 %v838, %v834
    %v1103 = vpack.c.b16 %v843, %v839
    %v1104 = vpack.c.b16 %v844, %v840
    %v1105 = vpack.c.b16 %v845, %v841
    %v1106 = vpack.c.b16 %v846, %v842
    %v1107 = vpack.c.b16 %v851, %v847
    %v1108 = vpack.c.b16 %v852, %v848
    %v1109 = vpack.c.b16 %v853, %v849
    %v1110 = vpack.c.b16 %v854, %v850
    %v1111 = vpack.c.b16 %v859, %v855
    %v1112 = vpack.c.b16 %v860, %v856
    %v1113 = vpack.c.b16 %v861, %v857
    %v1114 = vpack.c.b16 %v862, %v858
    %v1115 = vpack.c.b16 %v867, %v863
    %v1116 = vpack.c.b16 %v868, %v864
    %v1117 = vpack.c.b16 %v869, %v865
    %v1118 = vpack.c.b16 %v870, %v866
    %v1119 = vpack.c.b16 %v875, %v871
    %v1120 = vpack.c.b16 %v876, %v872
    %v1121 = vpack.c.b16 %v877, %v873
    %v1122 = vpack.c.b16 %v878, %v874
    %v1123 = vpack.c.b16 %v883, %v879
    %v1124 = vpack.c.b16 %v884, %v880
    %v1125 = vpack.c.b16 %v885, %v881
    %v1126 = vpack.c.b16 %v886, %v882
    %v1127 = vpack.c.b16 %v891, %v887
    %v1128 = vpack.c.b16 %v892, %v888
    %v1129 = vpack.c.b16 %v893, %v889
    %v1130 = vpack.c.b16 %v894, %v890
    %v1131 = vpack.c.b16 %v899, %v895
    %v1132 = vpack.c.b16 %v900, %v896
    %v1133 = vpack.c.b16 %v901, %v897
    %v1134 = vpack.c.b16 %v902, %v898
    %v1135 = vpack.c.b16 %v907, %v903
    %v1136 = vpack.c.b16 %v908, %v904
    %v1137 = vpack.c.b16 %v909, %v905
    %v1138 = vpack.c.b16 %v910, %v906
    %v1139 = vpack.c.b16 %v915, %v911
    %v1140 = vpack.c.b16 %v916, %v912
    %v1141 = vpack.c.b16 %v917, %v913
    %v1142 = vpack.c.b16 %v918, %v914
    %v1143 = vpack.c.b16 %v923, %v919
    %v1144 = vpack.c.b16 %v924, %v920
    %v1145 = vpack.c.b16 %v925, %v921
    %v1146 = vpack.c.b16 %v926, %v922
    %v1147 = vpack.c.b16 %v931, %v927
    %v1148 = vpack.c.b16 %v932, %v928
    %v1149 = vpack.c.b16 %v933, %v929
    %v1150 = vpack.c.b16 %v934, %v930
    %v1151 = vpack.c.b16 %v939, %v935
    %v1152 = vpack.c.b16 %v940, %v936
    %v1153 = vpack.c.b16 %v941, %v937
    %v1154 = vpack.c.b16 %v942, %v938
    %v1155 = vpack.c.b16 %v947, %v943
    %v1156 = vpack.c.b16 %v948, %v944
    %v1157 = vpack.c.b16 %v949, %v945
    %v1158 = vpack.c.b16 %v950, %v946
    %v1159 = vpack.c.b16 %v955, %v951
    %v1160 = vpack.c.b16 %v956, %v952
    %v1161 = vpack.c.b16 %v957, %v953
    %v1162 = vpack.c.b16 %v958, %v954
    %v1163 = vpack.c.b16 %v963, %v959
    %v1164 = vpack.c.b16 %v964, %v960
    %v1165 = vpack.c.b16 %v965, %v961
    %v1166 = vpack.c.b16 %v966, %v962
    %v1167 = vpack.c.b16 %v971, %v967
    %v1168 = vpack.c.b16 %v972, %v968
    %v1169 = vpack.c.b16 %v973, %v969
    %v1170 = vpack.c.b16 %v974, %v970
    %vm1367 = vcmask 130048
    %v1369 = vsel %vm1367, %v168, 0
    %1371 = vmatprep.subr.bf16.mxu0 %v976
    %1372 = vmatpush1.bf16.msra.mxu0 %v975
    %1373 = vmatprep.subr.bf16.mxu0 %v980
    %1374 = vmatpush1.bf16.msra.mxu0 %v979
    %1375 = vmatprep.subr.bf16.mxu0 %v984
    %1376 = vmatpush1.bf16.msra.mxu0 %v983
    %1377 = vmatprep.subr.bf16.mxu0 %v988
    %1378 = vmatpush1.bf16.msra.mxu0 %v987
    %1379 = vmatprep.subr.bf16.mxu0 %v992
    %1380 = vmatpush1.bf16.msra.mxu0 %v991
    %1381 = vmatprep.subr.bf16.mxu0 %v996
    %1382 = vmatpush1.bf16.msra.mxu0 %v995
    %1383 = vmatprep.subr.bf16.mxu0 %v1000
    %1384 = vmatpush1.bf16.msra.mxu0 %v999
    %1385 = vmatprep.subr.bf16.mxu0 %v1004
    %1386 = vmatpush1.bf16.msra.mxu0 %v1003
    %1387 = vmatprep.subr.bf16.mxu0 %v1008
    %1388 = vmatpush1.bf16.msra.mxu0 %v1007
    %1389 = vmatprep.subr.bf16.mxu0 %v1012
    %1390 = vmatpush1.bf16.msra.mxu0 %v1011
    %1391 = vmatprep.subr.bf16.mxu0 %v1016
    %1392 = vmatpush1.bf16.msra.mxu0 %v1015
    %1393 = vmatprep.subr.bf16.mxu0 %v1020
    %1394 = vmatpush1.bf16.msra.mxu0 %v1019
    %1395 = vmatprep.subr.bf16.mxu0 %v1024
    %1396 = vmatpush1.bf16.msra.mxu0 %v1023
    %1397 = vmatprep.subr.bf16.mxu0 %v1028
    %1398 = vmatpush1.bf16.msra.mxu0 %v1027
    %1399 = vmatprep.subr.bf16.mxu0 %v1032
    %1400 = vmatpush1.bf16.msra.mxu0 %v1031
    %1401 = vmatprep.subr.bf16.mxu0 %v1036
    %1402 = vmatpush1.bf16.msra.mxu0 %v1035
    %1403 = vmatprep.mubr.bf16.mxu0 %v163
    %1404 = vmatmul.mubr.bf16.gmra.mrb[0].mxu0 %v162
    %v1405 = vpop.f32.mrb[0].mxu0
    %v1406 = vadd.f32 %v370, %v1405
    %v1407 = vpop.f32.mrb[0].mxu0
    %v1408 = vadd.f32 %v374, %v1407
    %v1409 = vpop.f32.mrb[0].mxu0
    %v1410 = vadd.f32 %v370, %v1409
    %v1411 = vpop.f32.mrb[0].mxu0
    %v1412 = vadd.f32 %v374, %v1411
    %1413 = vdwg.mxu0
    %1414 = vmatprep.subr.bf16.mxu0 %v1040
    %1415 = vmatpush1.bf16.msra.mxu0 %v1039
    %1416 = vmatprep.subr.bf16.mxu0 %v1044
    %1417 = vmatpush1.bf16.msra.mxu0 %v1043
    %1418 = vmatprep.subr.bf16.mxu0 %v1048
    %1419 = vmatpush1.bf16.msra.mxu0 %v1047
    %1420 = vmatprep.subr.bf16.mxu0 %v1052
    %1421 = vmatpush1.bf16.msra.mxu0 %v1051
    %1422 = vmatprep.subr.bf16.mxu0 %v1056
    %1423 = vmatpush1.bf16.msra.mxu0 %v1055
    %1424 = vmatprep.subr.bf16.mxu0 %v1060
    %1425 = vmatpush1.bf16.msra.mxu0 %v1059
    %1426 = vmatprep.subr.bf16.mxu0 %v1064
    %1427 = vmatpush1.bf16.msra.mxu0 %v1063
    %1428 = vmatprep.subr.bf16.mxu0 %v1068
    %1429 = vmatpush1.bf16.msra.mxu0 %v1067
    %1430 = vmatprep.subr.bf16.mxu0 %v1072
    %1431 = vmatpush1.bf16.msra.mxu0 %v1071
    %1432 = vmatprep.subr.bf16.mxu0 %v1076
    %1433 = vmatpush1.bf16.msra.mxu0 %v1075
    %1434 = vmatprep.subr.bf16.mxu0 %v1080
    %1435 = vmatpush1.bf16.msra.mxu0 %v1079
    %1436 = vmatprep.subr.bf16.mxu0 %v1084
    %1437 = vmatpush1.bf16.msra.mxu0 %v1083
    %1438 = vmatprep.subr.bf16.mxu0 %v1088
    %1439 = vmatpush1.bf16.msra.mxu0 %v1087
    %1440 = vmatprep.subr.bf16.mxu0 %v1092
    %1441 = vmatpush1.bf16.msra.mxu0 %v1091
    %1442 = vmatprep.subr.bf16.mxu0 %v1096
    %1443 = vmatpush1.bf16.msra.mxu0 %v1095
    %1444 = vmatprep.subr.bf16.mxu0 %v1100
    %1445 = vmatpush1.bf16.msra.mxu0 %v1099
    %1446 = vmatprep.mubr.bf16.mxu0 %v165
    %1447 = vmatmul.mubr.bf16.gmra.mrb[0].mxu0 %v164
    %v1448 = vpop.f32.mrb[0].mxu0
    %v1449 = vadd.f32 %v1406, %v1448
    %v1450 = vpop.f32.mrb[0].mxu0
    %v1451 = vadd.f32 %v1408, %v1450
    %v1452 = vpop.f32.mrb[0].mxu0
    %v1453 = vadd.f32 %v1410, %v1452
    %v1454 = vpop.f32.mrb[0].mxu0
    %v1455 = vadd.f32 %v1412, %v1454
    %1456 = vdwg.mxu0
    %1457 = vmatprep.subr.bf16.mxu0 %v1104
    %1458 = vmatpush1.bf16.msra.mxu0 %v1103
    %1459 = vmatprep.subr.bf16.mxu0 %v1108
    %1460 = vmatpush1.bf16.msra.mxu0 %v1107
    %1461 = vmatprep.subr.bf16.mxu0 %v1112
    %1462 = vmatpush1.bf16.msra.mxu0 %v1111
    %1463 = vmatprep.subr.bf16.mxu0 %v1116
    %1464 = vmatpush1.bf16.msra.mxu0 %v1115
    %1465 = vmatprep.subr.bf16.mxu0 %v1120
    %1466 = vmatpush1.bf16.msra.mxu0 %v1119
    %1467 = vmatprep.subr.bf16.mxu0 %v1124
    %1468 = vmatpush1.bf16.msra.mxu0 %v1123
    %1469 = vmatprep.subr.bf16.mxu0 %v1128
    %1470 = vmatpush1.bf16.msra.mxu0 %v1127
    %1471 = vmatprep.subr.bf16.mxu0 %v1132
    %1472 = vmatpush1.bf16.msra.mxu0 %v1131
    %1473 = vmatprep.subr.bf16.mxu0 %v1136
    %1474 = vmatpush1.bf16.msra.mxu0 %v1135
    %1475 = vmatprep.subr.bf16.mxu0 %v1140
    %1476 = vmatpush1.bf16.msra.mxu0 %v1139
    %1477 = vmatprep.subr.bf16.mxu0 %v1144
    %1478 = vmatpush1.bf16.msra.mxu0 %v1143
    %1479 = vmatprep.subr.bf16.mxu0 %v1148
    %1480 = vmatpush1.bf16.msra.mxu0 %v1147
    %1481 = vmatprep.subr.bf16.mxu0 %v1152
    %1482 = vmatpush1.bf16.msra.mxu0 %v1151
    %1483 = vmatprep.subr.bf16.mxu0 %v1156
    %1484 = vmatpush1.bf16.msra.mxu0 %v1155
    %1485 = vmatprep.subr.bf16.mxu0 %v1160
    %1486 = vmatpush1.bf16.msra.mxu0 %v1159
    %1487 = vmatprep.subr.bf16.mxu0 %v1164
    %1488 = vmatpush1.bf16.msra.mxu0 %v1163
    %1489 = vmatprep.mubr.bf16.mxu0 %v167
    %1490 = vmatmul.mubr.bf16.gmra.mrb[0].mxu0 %v166
    %v1491 = vpop.f32.mrb[0].mxu0
    %v1492 = vadd.f32 %v1449, %v1491
    %v1493 = vpop.f32.mrb[0].mxu0
    %v1494 = vadd.f32 %v1451, %v1493
    %v1495 = vpop.f32.mrb[0].mxu0
    %v1496 = vadd.f32 %v1453, %v1495
    %v1497 = vpop.f32.mrb[0].mxu0
    %v1498 = vadd.f32 %v1455, %v1497
    %1499 = vdwg.mxu0
    %1500 = vmatprep.subr.bf16.mxu0 %v1168
    %1501 = vmatpush1.bf16.msra.mxu0 %v1167
    %1502 = vmatprep.subr.bf16.mxu0 0
    %1503 = vmatpush1.bf16.msra.mxu0 0
    %1504 = vmatprep.subr.bf16.mxu0 0
    %1505 = vmatpush1.bf16.msra.mxu0 0
    %1506 = vmatprep.subr.bf16.mxu0 0
    %1507 = vmatpush1.bf16.msra.mxu0 0
    %1508 = vmatprep.subr.bf16.mxu0 0
    %1509 = vmatpush1.bf16.msra.mxu0 0
    %1510 = vmatprep.subr.bf16.mxu0 0
    %1511 = vmatpush1.bf16.msra.mxu0 0
    %1512 = vmatprep.subr.bf16.mxu0 0
    %1513 = vmatpush1.bf16.msra.mxu0 0
    %1514 = vmatprep.subr.bf16.mxu0 0
    %1515 = vmatpush1.bf16.msra.mxu0 0
    %1516 = vmatprep.subr.bf16.mxu0 0
    %1517 = vmatpush1.bf16.msra.mxu0 0
    %1518 = vmatprep.subr.bf16.mxu0 0
    %1519 = vmatpush1.bf16.msra.mxu0 0
    %1520 = vmatprep.subr.bf16.mxu0 0
    %1521 = vmatpush1.bf16.msra.mxu0 0
    %1522 = vmatprep.subr.bf16.mxu0 0
    %1523 = vmatpush1.bf16.msra.mxu0 0
    %1524 = vmatprep.subr.bf16.mxu0 0
    %1525 = vmatpush1.bf16.msra.mxu0 0
    %1526 = vmatprep.subr.bf16.mxu0 0
    %1527 = vmatpush1.bf16.msra.mxu0 0
    %1528 = vmatprep.subr.bf16.mxu0 0
    %1529 = vmatpush1.bf16.msra.mxu0 0
    %1530 = vmatprep.subr.bf16.mxu0 0
    %1531 = vmatpush1.bf16.msra.mxu0 0
    %1532 = vmatprep.mubr.bf16.mxu0 0
    %1533 = vmatmul.mubr.bf16.gmra.mrb[0].mxu0 %v1369
    %v1534 = vpop.f32.mrb[0].mxu0
    %v1535 = vadd.f32 %v1492, %v1534
    %v1536 = vpop.f32.mrb[0].mxu0
    %v1537 = vadd.f32 %v1494, %v1536
    %v1538 = vpop.f32.mrb[0].mxu0
    %v1539 = vadd.f32 %v1496, %v1538
    %v1540 = vpop.f32.mrb[0].mxu0
    %v1541 = vadd.f32 %v1498, %v1540
    %1542 = vdwg.mxu0
    %1543 = vmatprep.subr.bf16.mxu0 %v978
    %1544 = vmatpush1.bf16.msra.mxu0 %v977
    %1545 = vmatprep.subr.bf16.mxu0 %v982
    %1546 = vmatpush1.bf16.msra.mxu0 %v981
    %1547 = vmatprep.subr.bf16.mxu0 %v986
    %1548 = vmatpush1.bf16.msra.mxu0 %v985
    %1549 = vmatprep.subr.bf16.mxu0 %v990
    %1550 = vmatpush1.bf16.msra.mxu0 %v989
    %1551 = vmatprep.subr.bf16.mxu0 %v994
    %1552 = vmatpush1.bf16.msra.mxu0 %v993
    %1553 = vmatprep.subr.bf16.mxu0 %v998
    %1554 = vmatpush1.bf16.msra.mxu0 %v997
    %1555 = vmatprep.subr.bf16.mxu0 %v1002
    %1556 = vmatpush1.bf16.msra.mxu0 %v1001
    %1557 = vmatprep.subr.bf16.mxu0 %v1006
    %1558 = vmatpush1.bf16.msra.mxu0 %v1005
    %1559 = vmatprep.subr.bf16.mxu0 %v1010
    %1560 = vmatpush1.bf16.msra.mxu0 %v1009
    %1561 = vmatprep.subr.bf16.mxu0 %v1014
    %1562 = vmatpush1.bf16.msra.mxu0 %v1013
    %1563 = vmatprep.subr.bf16.mxu0 %v1018
    %1564 = vmatpush1.bf16.msra.mxu0 %v1017
    %1565 = vmatprep.subr.bf16.mxu0 %v1022
    %1566 = vmatpush1.bf16.msra.mxu0 %v1021
    %1567 = vmatprep.subr.bf16.mxu0 %v1026
    %1568 = vmatpush1.bf16.msra.mxu0 %v1025
    %1569 = vmatprep.subr.bf16.mxu0 %v1030
    %1570 = vmatpush1.bf16.msra.mxu0 %v1029
    %1571 = vmatprep.subr.bf16.mxu0 %v1034
    %1572 = vmatpush1.bf16.msra.mxu0 %v1033
    %1573 = vmatprep.subr.bf16.mxu0 %v1038
    %1574 = vmatpush1.bf16.msra.mxu0 %v1037
    %1575 = vmatprep.mubr.bf16.mxu0 %v163
    %1576 = vmatmul.mubr.bf16.gmra.mrb[0].mxu0 %v162
    %v1577 = vpop.f32.mrb[0].mxu0
    %v1578 = vadd.f32 %v378, %v1577
    %v1579 = vpop.f32.mrb[0].mxu0
    %v1580 = vadd.f32 %v382, %v1579
    %v1581 = vpop.f32.mrb[0].mxu0
    %v1582 = vadd.f32 %v378, %v1581
    %v1583 = vpop.f32.mrb[0].mxu0
    %v1584 = vadd.f32 %v382, %v1583
    %1585 = vdwg.mxu0
    %1586 = vmatprep.subr.bf16.mxu0 %v1042
    %1587 = vmatpush1.bf16.msra.mxu0 %v1041
    %1588 = vmatprep.subr.bf16.mxu0 %v1046
    %1589 = vmatpush1.bf16.msra.mxu0 %v1045
    %1590 = vmatprep.subr.bf16.mxu0 %v1050
    %1591 = vmatpush1.bf16.msra.mxu0 %v1049
    %1592 = vmatprep.subr.bf16.mxu0 %v1054
    %1593 = vmatpush1.bf16.msra.mxu0 %v1053
    %1594 = vmatprep.subr.bf16.mxu0 %v1058
    %1595 = vmatpush1.bf16.msra.mxu0 %v1057
    %1596 = vmatprep.subr.bf16.mxu0 %v1062
    %1597 = vmatpush1.bf16.msra.mxu0 %v1061
    %1598 = vmatprep.subr.bf16.mxu0 %v1066
    %1599 = vmatpush1.bf16.msra.mxu0 %v1065
    %1600 = vmatprep.subr.bf16.mxu0 %v1070
    %1601 = vmatpush1.bf16.msra.mxu0 %v1069
    %1602 = vmatprep.subr.bf16.mxu0 %v1074
    %1603 = vmatpush1.bf16.msra.mxu0 %v1073
    %1604 = vmatprep.subr.bf16.mxu0 %v1078
    %1605 = vmatpush1.bf16.msra.mxu0 %v1077
    %1606 = vmatprep.subr.bf16.mxu0 %v1082
    %1607 = vmatpush1.bf16.msra.mxu0 %v1081
    %1608 = vmatprep.subr.bf16.mxu0 %v1086
    %1609 = vmatpush1.bf16.msra.mxu0 %v1085
    %1610 = vmatprep.subr.bf16.mxu0 %v1090
    %1611 = vmatpush1.bf16.msra.mxu0 %v1089
    %1612 = vmatprep.subr.bf16.mxu0 %v1094
    %1613 = vmatpush1.bf16.msra.mxu0 %v1093
    %1614 = vmatprep.subr.bf16.mxu0 %v1098
    %1615 = vmatpush1.bf16.msra.mxu0 %v1097
    %1616 = vmatprep.subr.bf16.mxu0 %v1102
    %1617 = vmatpush1.bf16.msra.mxu0 %v1101
    %1618 = vmatprep.mubr.bf16.mxu0 %v165
    %1619 = vmatmul.mubr.bf16.gmra.mrb[0].mxu0 %v164
    %v1620 = vpop.f32.mrb[0].mxu0
    %v1621 = vadd.f32 %v1578, %v1620
    %v1622 = vpop.f32.mrb[0].mxu0
    %v1623 = vadd.f32 %v1580, %v1622
    %v1624 = vpop.f32.mrb[0].mxu0
    %v1625 = vadd.f32 %v1582, %v1624
    %v1626 = vpop.f32.mrb[0].mxu0
    %v1627 = vadd.f32 %v1584, %v1626
    %1628 = vdwg.mxu0
    %1629 = vmatprep.subr.bf16.mxu0 %v1106
    %1630 = vmatpush1.bf16.msra.mxu0 %v1105
    %1631 = vmatprep.subr.bf16.mxu0 %v1110
    %1632 = vmatpush1.bf16.msra.mxu0 %v1109
    %1633 = vmatprep.subr.bf16.mxu0 %v1114
    %1634 = vmatpush1.bf16.msra.mxu0 %v1113
    %1635 = vmatprep.subr.bf16.mxu0 %v1118
    %1636 = vmatpush1.bf16.msra.mxu0 %v1117
    %1637 = vmatprep.subr.bf16.mxu0 %v1122
    %1638 = vmatpush1.bf16.msra.mxu0 %v1121
    %1639 = vmatprep.subr.bf16.mxu0 %v1126
    %1640 = vmatpush1.bf16.msra.mxu0 %v1125
    %1641 = vmatprep.subr.bf16.mxu0 %v1130
    %1642 = vmatpush1.bf16.msra.mxu0 %v1129
    %1643 = vmatprep.subr.bf16.mxu0 %v1134
    %1644 = vmatpush1.bf16.msra.mxu0 %v1133
    %1645 = vmatprep.subr.bf16.mxu0 %v1138
    %1646 = vmatpush1.bf16.msra.mxu0 %v1137
    %1647 = vmatprep.subr.bf16.mxu0 %v1142
    %1648 = vmatpush1.bf16.msra.mxu0 %v1141
    %1649 = vmatprep.subr.bf16.mxu0 %v1146
    %1650 = vmatpush1.bf16.msra.mxu0 %v1145
    %1651 = vmatprep.subr.bf16.mxu0 %v1150
    %1652 = vmatpush1.bf16.msra.mxu0 %v1149
    %1653 = vmatprep.subr.bf16.mxu0 %v1154
    %1654 = vmatpush1.bf16.msra.mxu0 %v1153
    %1655 = vmatprep.subr.bf16.mxu0 %v1158
    %1656 = vmatpush1.bf16.msra.mxu0 %v1157
    %1657 = vmatprep.subr.bf16.mxu0 %v1162
    %1658 = vmatpush1.bf16.msra.mxu0 %v1161
    %1659 = vmatprep.subr.bf16.mxu0 %v1166
    %1660 = vmatpush1.bf16.msra.mxu0 %v1165
    %1661 = vmatprep.mubr.bf16.mxu0 %v167
    %1662 = vmatmul.mubr.bf16.gmra.mrb[0].mxu0 %v166
    %v1663 = vpop.f32.mrb[0].mxu0
    %v1664 = vadd.f32 %v1621, %v1663
    %v1665 = vpop.f32.mrb[0].mxu0
    %v1666 = vadd.f32 %v1623, %v1665
    %v1667 = vpop.f32.mrb[0].mxu0
    %v1668 = vadd.f32 %v1625, %v1667
    %v1669 = vpop.f32.mrb[0].mxu0
    %v1670 = vadd.f32 %v1627, %v1669
    %1671 = vdwg.mxu0
    %1672 = vmatprep.subr.bf16.mxu0 %v1170
    %1673 = vmatpush1.bf16.msra.mxu0 %v1169
    %1674 = vmatprep.subr.bf16.mxu0 0
    %1675 = vmatpush1.bf16.msra.mxu0 0
    %1676 = vmatprep.subr.bf16.mxu0 0
    %1677 = vmatpush1.bf16.msra.mxu0 0
    %1678 = vmatprep.subr.bf16.mxu0 0
    %1679 = vmatpush1.bf16.msra.mxu0 0
    %1680 = vmatprep.subr.bf16.mxu0 0
    %1681 = vmatpush1.bf16.msra.mxu0 0
    %1682 = vmatprep.subr.bf16.mxu0 0
    %1683 = vmatpush1.bf16.msra.mxu0 0
    %1684 = vmatprep.subr.bf16.mxu0 0
    %1685 = vmatpush1.bf16.msra.mxu0 0
    %1686 = vmatprep.subr.bf16.mxu0 0
    %1687 = vmatpush1.bf16.msra.mxu0 0
    %1688 = vmatprep.subr.bf16.mxu0 0
    %1689 = vmatpush1.bf16.msra.mxu0 0
    %1690 = vmatprep.subr.bf16.mxu0 0
    %1691 = vmatpush1.bf16.msra.mxu0 0
    %1692 = vmatprep.subr.bf16.mxu0 0
    %1693 = vmatpush1.bf16.msra.mxu0 0
    %1694 = vmatprep.subr.bf16.mxu0 0
    %1695 = vmatpush1.bf16.msra.mxu0 0
    %1696 = vmatprep.subr.bf16.mxu0 0
    %1697 = vmatpush1.bf16.msra.mxu0 0
    %1698 = vmatprep.subr.bf16.mxu0 0
    %1699 = vmatpush1.bf16.msra.mxu0 0
    %1700 = vmatprep.subr.bf16.mxu0 0
    %1701 = vmatpush1.bf16.msra.mxu0 0
    %1702 = vmatprep.subr.bf16.mxu0 0
    %1703 = vmatpush1.bf16.msra.mxu0 0
    %1704 = vmatprep.mubr.bf16.mxu0 0
    %1705 = vmatmul.mubr.bf16.gmra.mrb[0].mxu0 %v1369
    %v1706 = vpop.f32.mrb[0].mxu0
    %v1707 = vadd.f32 %v1664, %v1706
    %v1708 = vpop.f32.mrb[0].mxu0
    %v1709 = vadd.f32 %v1666, %v1708
    %v1710 = vpop.f32.mrb[0].mxu0
    %v1711 = vadd.f32 %v1668, %v1710
    %v1712 = vpop.f32.mrb[0].mxu0
    %v1713 = vadd.f32 %v1670, %v1712
    %1714 = vdwg.mxu0
    %v1715 = vmax.f32 %v1535, 0.0
    %v1716 = vmax.f32 %v1537, 0.0
    %v1717 = vmax.f32 %v1707, 0.0
    %v1718 = vmax.f32 %v1709, 0.0
    %v1719 = vmax.f32 %v1539, 0.0
    %v1720 = vmax.f32 %v1541, 0.0
    %v1721 = vmax.f32 %v1711, 0.0
    %v1722 = vmax.f32 %v1713, 0.0
    %v1723 = vpack.c.bf16 %v1719, %v1715
    %v1724 = vpack.c.bf16 %v1720, %v1716
    %v1725 = vpack.c.bf16 %v1721, %v1717
    %v1726 = vpack.c.bf16 %v1722, %v1718
    %v1727 = vld [vmem:[#allocation8] sm:$0xff]
    %v1728 = vld [vmem:[#allocation8 + $0x8] sm:$0xff]
    %v1729 = vld [vmem:[#allocation8 + $0x10] sm:$0xff]
    %v1730 = vld [vmem:[#allocation8 + $0x18] sm:$0xff]
    %v1731 = vld [vmem:[#allocation8 + $0x20] sm:$0xff]
    %v1732 = vld [vmem:[#allocation8 + $0x28] sm:$0xff]
    %v1733 = vld [vmem:[#allocation8 + $0x30] sm:$0xff]
    %v1734 = vld [vmem:[#allocation8 + $0x38] sm:$0xff]
    %v1735 = vld [vmem:[#allocation8 + $0x40] sm:$0xff]
    %v1736 = vld [vmem:[#allocation8 + $0x48] sm:$0xff]
    %v1737 = vld [vmem:[#allocation8 + $0x50] sm:$0xff]
    %v1738 = vld [vmem:[#allocation8 + $0x58] sm:$0xff]
    %v1739 = vld [vmem:[#allocation8 + $0x60] sm:$0xff]
    %v1740 = vld [vmem:[#allocation8 + $0x68] sm:$0xff]
    %v1741 = vld [vmem:[#allocation8 + $0x70] sm:$0xff]
    %v1742 = vld [vmem:[#allocation8 + $0x78] sm:$0xff]
    %v1743 = vld [vmem:[#allocation8 + $0x80] sm:$0xff]
    %v1744 = vld [vmem:[#allocation8 + $0x88] sm:$0xff]
    %v1745 = vld [vmem:[#allocation8 + $0x90] sm:$0xff]
    %v1746 = vld [vmem:[#allocation8 + $0x98] sm:$0xff]
    %v1747 = vld [vmem:[#allocation8 + $0xa0] sm:$0xff]
    %v1748 = vld [vmem:[#allocation8 + $0xa8] sm:$0xff]
    %v1749 = vld [vmem:[#allocation8 + $0xb0] sm:$0xff]
    %v1750 = vld [vmem:[#allocation8 + $0xb8] sm:$0xff]
    %v1751 = vld [vmem:[#allocation8 + $0xc0] sm:$0xff]
    %v1752 = vld [vmem:[#allocation8 + $0xc8] sm:$0xff]
    %v1753 = vld [vmem:[#allocation8 + $0xd0] sm:$0xff]
    %v1754 = vld [vmem:[#allocation8 + $0xd8] sm:$0xff]
    %v1755 = vld [vmem:[#allocation8 + $0xe0] sm:$0xff]
    %v1756 = vld [vmem:[#allocation8 + $0xe8] sm:$0xff]
    %v1757 = vld [vmem:[#allocation8 + $0xf0] sm:$0xff]
    %v1758 = vld [vmem:[#allocation8 + $0xf8] sm:$0xff]
    %v1759 = vld [vmem:[#allocation8 + $0x100] sm:$0xff]
    %v1760 = vld [vmem:[#allocation8 + $0x108] sm:$0xff]
    %v1761 = vld [vmem:[#allocation8 + $0x110] sm:$0xff]
    %v1762 = vld [vmem:[#allocation8 + $0x118] sm:$0xff]
    %v1763 = vld [vmem:[#allocation8 + $0x120] sm:$0xff]
    %v1764 = vld [vmem:[#allocation8 + $0x128] sm:$0xff]
    %v1765 = vld [vmem:[#allocation8 + $0x130] sm:$0xff]
    %v1766 = vld [vmem:[#allocation8 + $0x138] sm:$0xff]
    %v1767 = vld [vmem:[#allocation8 + $0x140] sm:$0xff]
    %v1768 = vld [vmem:[#allocation8 + $0x148] sm:$0xff]
    %v1769 = vld [vmem:[#allocation8 + $0x150] sm:$0xff]
    %v1770 = vld [vmem:[#allocation8 + $0x158] sm:$0xff]
    %v1771 = vld [vmem:[#allocation8 + $0x160] sm:$0xff]
    %v1772 = vld [vmem:[#allocation8 + $0x168] sm:$0xff]
    %v1773 = vld [vmem:[#allocation8 + $0x170] sm:$0xff]
    %v1774 = vld [vmem:[#allocation8 + $0x178] sm:$0xff]
    %v1775 = vld [vmem:[#allocation8 + $0x180] sm:$0xff]
    %v1776 = vld [vmem:[#allocation10] sm:$0x3]
    %v1778 = vlaneseq
    %v1779 = vshrl.u32 %v1778, 7
    %v1780 = vsub.s32 0, %v1779
    %v1781 = vrot.slane %v1776, %v1780
    %v1782 = vlaneseq
    %v1783 = vshrl.u32 %v1782, 7
    %v1784 = vsub.s32 1, %v1783
    %v1785 = vrot.slane %v1776, %v1784
    %v1837 = vunpack.c.l.b16 %v1727
    %v1838 = vunpack.c.h.b16 %v1727
    %v1839 = vunpack.c.l.b16 %v1728
    %v1840 = vunpack.c.h.b16 %v1728
    %v1841 = vunpack.c.l.b16 %v1729
    %v1842 = vunpack.c.h.b16 %v1729
    %v1843 = vunpack.c.l.b16 %v1730
    %v1844 = vunpack.c.h.b16 %v1730
    %v1845 = vunpack.c.l.b16 %v1731
    %v1846 = vunpack.c.h.b16 %v1731
    %v1847 = vunpack.c.l.b16 %v1732
    %v1848 = vunpack.c.h.b16 %v1732
    %v1849 = vunpack.c.l.b16 %v1733
    %v1850 = vunpack.c.h.b16 %v1733
    %v1851 = vunpack.c.l.b16 %v1734
    %v1852 = vunpack.c.h.b16 %v1734
    %v1853 = vunpack.c.l.b16 %v1735
    %v1854 = vunpack.c.h.b16 %v1735
    %v1855 = vunpack.c.l.b16 %v1736
    %v1856 = vunpack.c.h.b16 %v1736
    %v1857 = vunpack.c.l.b16 %v1737
    %v1858 = vunpack.c.h.b16 %v1737
    %v1859 = vunpack.c.l.b16 %v1738
    %v1860 = vunpack.c.h.b16 %v1738
    %v1861 = vunpack.c.l.b16 %v1739
    %v1862 = vunpack.c.h.b16 %v1739
    %v1863 = vunpack.c.l.b16 %v1740
    %v1864 = vunpack.c.h.b16 %v1740
    %v1865 = vunpack.c.l.b16 %v1741
    %v1866 = vunpack.c.h.b16 %v1741
    %v1867 = vunpack.c.l.b16 %v1742
    %v1868 = vunpack.c.h.b16 %v1742
    %v1869 = vunpack.c.l.b16 %v1743
    %v1870 = vunpack.c.h.b16 %v1743
    %v1871 = vunpack.c.l.b16 %v1744
    %v1872 = vunpack.c.h.b16 %v1744
    %v1873 = vunpack.c.l.b16 %v1745
    %v1874 = vunpack.c.h.b16 %v1745
    %v1875 = vunpack.c.l.b16 %v1746
    %v1876 = vunpack.c.h.b16 %v1746
    %v1877 = vunpack.c.l.b16 %v1747
    %v1878 = vunpack.c.h.b16 %v1747
    %v1879 = vunpack.c.l.b16 %v1748
    %v1880 = vunpack.c.h.b16 %v1748
    %v1881 = vunpack.c.l.b16 %v1749
    %v1882 = vunpack.c.h.b16 %v1749
    %v1883 = vunpack.c.l.b16 %v1750
    %v1884 = vunpack.c.h.b16 %v1750
    %v1885 = vunpack.c.l.b16 %v1751
    %v1886 = vunpack.c.h.b16 %v1751
    %v1887 = vunpack.c.l.b16 %v1752
    %v1888 = vunpack.c.h.b16 %v1752
    %v1889 = vunpack.c.l.b16 %v1753
    %v1890 = vunpack.c.h.b16 %v1753
    %v1891 = vunpack.c.l.b16 %v1754
    %v1892 = vunpack.c.h.b16 %v1754
    %v1893 = vunpack.c.l.b16 %v1755
    %v1894 = vunpack.c.h.b16 %v1755
    %v1895 = vunpack.c.l.b16 %v1756
    %v1896 = vunpack.c.h.b16 %v1756
    %v1897 = vunpack.c.l.b16 %v1757
    %v1898 = vunpack.c.h.b16 %v1757
    %v1899 = vunpack.c.l.b16 %v1758
    %v1900 = vunpack.c.h.b16 %v1758
    %v1901 = vunpack.c.l.b16 %v1759
    %v1902 = vunpack.c.h.b16 %v1759
    %v1903 = vunpack.c.l.b16 %v1760
    %v1904 = vunpack.c.h.b16 %v1760
    %v1905 = vunpack.c.l.b16 %v1761
    %v1906 = vunpack.c.h.b16 %v1761
    %v1907 = vunpack.c.l.b16 %v1762
    %v1908 = vunpack.c.h.b16 %v1762
    %v1909 = vunpack.c.l.b16 %v1763
    %v1910 = vunpack.c.h.b16 %v1763
    %v1911 = vunpack.c.l.b16 %v1764
    %v1912 = vunpack.c.h.b16 %v1764
    %v1913 = vunpack.c.l.b16 %v1765
    %v1914 = vunpack.c.h.b16 %v1765
    %v1915 = vunpack.c.l.b16 %v1766
    %v1916 = vunpack.c.h.b16 %v1766
    %v1917 = vunpack.c.l.b16 %v1767
    %v1918 = vunpack.c.h.b16 %v1767
    %v1919 = vunpack.c.l.b16 %v1768
    %v1920 = vunpack.c.h.b16 %v1768
    %v1921 = vunpack.c.l.b16 %v1769
    %v1922 = vunpack.c.h.b16 %v1769
    %v1923 = vunpack.c.l.b16 %v1770
    %v1924 = vunpack.c.h.b16 %v1770
    %v1925 = vunpack.c.l.b16 %v1771
    %v1926 = vunpack.c.h.b16 %v1771
    %v1927 = vunpack.c.l.b16 %v1772
    %v1928 = vunpack.c.h.b16 %v1772
    %v1929 = vunpack.c.l.b16 %v1773
    %v1930 = vunpack.c.h.b16 %v1773
    %v1931 = vunpack.c.l.b16 %v1774
    %v1932 = vunpack.c.h.b16 %v1774
    %v1933 = vunpack.c.l.b16 %v1775
    %v1934 = vunpack.c.h.b16 %v1775
    %v1935 = vpack.c.b16 %v1839, %v1837
    %v1936 = vpack.c.b16 %v1840, %v1838
    %v1937 = vpack.c.b16 %v1843, %v1841
    %v1938 = vpack.c.b16 %v1844, %v1842
    %v1939 = vpack.c.b16 %v1847, %v1845
    %v1940 = vpack.c.b16 %v1848, %v1846
    %v1941 = vpack.c.b16 %v1851, %v1849
    %v1942 = vpack.c.b16 %v1852, %v1850
    %v1943 = vpack.c.b16 %v1855, %v1853
    %v1944 = vpack.c.b16 %v1856, %v1854
    %v1945 = vpack.c.b16 %v1859, %v1857
    %v1946 = vpack.c.b16 %v1860, %v1858
    %v1947 = vpack.c.b16 %v1863, %v1861
    %v1948 = vpack.c.b16 %v1864, %v1862
    %v1949 = vpack.c.b16 %v1867, %v1865
    %v1950 = vpack.c.b16 %v1868, %v1866
    %v1951 = vpack.c.b16 %v1871, %v1869
    %v1952 = vpack.c.b16 %v1872, %v1870
    %v1953 = vpack.c.b16 %v1875, %v1873
    %v1954 = vpack.c.b16 %v1876, %v1874
    %v1955 = vpack.c.b16 %v1879, %v1877
    %v1956 = vpack.c.b16 %v1880, %v1878
    %v1957 = vpack.c.b16 %v1883, %v1881
    %v1958 = vpack.c.b16 %v1884, %v1882
    %v1959 = vpack.c.b16 %v1887, %v1885
    %v1960 = vpack.c.b16 %v1888, %v1886
    %v1961 = vpack.c.b16 %v1891, %v1889
    %v1962 = vpack.c.b16 %v1892, %v1890
    %v1963 = vpack.c.b16 %v1895, %v1893
    %v1964 = vpack.c.b16 %v1896, %v1894
    %v1965 = vpack.c.b16 %v1899, %v1897
    %v1966 = vpack.c.b16 %v1900, %v1898
    %v1967 = vpack.c.b16 %v1903, %v1901
    %v1968 = vpack.c.b16 %v1904, %v1902
    %v1969 = vpack.c.b16 %v1907, %v1905
    %v1970 = vpack.c.b16 %v1908, %v1906
    %v1971 = vpack.c.b16 %v1911, %v1909
    %v1972 = vpack.c.b16 %v1912, %v1910
    %v1973 = vpack.c.b16 %v1915, %v1913
    %v1974 = vpack.c.b16 %v1916, %v1914
    %v1975 = vpack.c.b16 %v1919, %v1917
    %v1976 = vpack.c.b16 %v1920, %v1918
    %v1977 = vpack.c.b16 %v1923, %v1921
    %v1978 = vpack.c.b16 %v1924, %v1922
    %v1979 = vpack.c.b16 %v1927, %v1925
    %v1980 = vpack.c.b16 %v1928, %v1926
    %v1981 = vpack.c.b16 %v1931, %v1929
    %v1982 = vpack.c.b16 %v1932, %v1930
    %v1983 = vpack.c.b16 %v1933, %v1933
    %v1984 = vpack.c.b16 %v1934, %v1934
    %vm2033 = vcmask 64512
    %v2035 = vsel %vm2033, %v1726, 0
    %vm2037 = vcmask 1043456
    %v2039 = vsel %vm2037, %v1983, 0
    %v2042 = vsel %vm2037, %v1984, 0
    %2044 = vmatprep.subr.bf16.mxu0 %v1936
    %2045 = vmatpush1.bf16.msra.mxu0 %v1935
    %2046 = vmatprep.subr.bf16.mxu0 %v1938
    %2047 = vmatpush1.bf16.msra.mxu0 %v1937
    %2048 = vmatprep.subr.bf16.mxu0 %v1940
    %2049 = vmatpush1.bf16.msra.mxu0 %v1939
    %2050 = vmatprep.subr.bf16.mxu0 %v1942
    %2051 = vmatpush1.bf16.msra.mxu0 %v1941
    %2052 = vmatprep.subr.bf16.mxu0 %v1944
    %2053 = vmatpush1.bf16.msra.mxu0 %v1943
    %2054 = vmatprep.subr.bf16.mxu0 %v1946
    %2055 = vmatpush1.bf16.msra.mxu0 %v1945
    %2056 = vmatprep.subr.bf16.mxu0 %v1948
    %2057 = vmatpush1.bf16.msra.mxu0 %v1947
    %2058 = vmatprep.subr.bf16.mxu0 %v1950
    %2059 = vmatpush1.bf16.msra.mxu0 %v1949
    %2060 = vmatprep.subr.bf16.mxu0 %v1952
    %2061 = vmatpush1.bf16.msra.mxu0 %v1951
    %2062 = vmatprep.subr.bf16.mxu0 %v1954
    %2063 = vmatpush1.bf16.msra.mxu0 %v1953
    %2064 = vmatprep.subr.bf16.mxu0 %v1956
    %2065 = vmatpush1.bf16.msra.mxu0 %v1955
    %2066 = vmatprep.subr.bf16.mxu0 %v1958
    %2067 = vmatpush1.bf16.msra.mxu0 %v1957
    %2068 = vmatprep.subr.bf16.mxu0 %v1960
    %2069 = vmatpush1.bf16.msra.mxu0 %v1959
    %2070 = vmatprep.subr.bf16.mxu0 %v1962
    %2071 = vmatpush1.bf16.msra.mxu0 %v1961
    %2072 = vmatprep.subr.bf16.mxu0 %v1964
    %2073 = vmatpush1.bf16.msra.mxu0 %v1963
    %2074 = vmatprep.subr.bf16.mxu0 %v1966
    %2075 = vmatpush1.bf16.msra.mxu0 %v1965
    %2076 = vmatprep.mubr.bf16.mxu0 %v1724
    %2077 = vmatmul.mubr.bf16.gmra.mrb[0].mxu0 %v1723
    %v2078 = vpop.f32.mrb[0].mxu0
    %v2079 = vadd.f32 %v1781, %v2078
    %v2080 = vpop.f32.mrb[0].mxu0
    %v2081 = vadd.f32 %v1785, %v2080
    %v2082 = vpop.f32.mrb[0].mxu0
    %v2083 = vadd.f32 %v1781, %v2082
    %v2084 = vpop.f32.mrb[0].mxu0
    %v2085 = vadd.f32 %v1785, %v2084
    %2086 = vdwg.mxu0
    %2087 = vmatprep.subr.bf16.mxu0 %v1968
    %2088 = vmatpush1.bf16.msra.mxu0 %v1967
    %2089 = vmatprep.subr.bf16.mxu0 %v1970
    %2090 = vmatpush1.bf16.msra.mxu0 %v1969
    %2091 = vmatprep.subr.bf16.mxu0 %v1972
    %2092 = vmatpush1.bf16.msra.mxu0 %v1971
    %2093 = vmatprep.subr.bf16.mxu0 %v1974
    %2094 = vmatpush1.bf16.msra.mxu0 %v1973
    %2095 = vmatprep.subr.bf16.mxu0 %v1976
    %2096 = vmatpush1.bf16.msra.mxu0 %v1975
    %2097 = vmatprep.subr.bf16.mxu0 %v1978
    %2098 = vmatpush1.bf16.msra.mxu0 %v1977
    %2099 = vmatprep.subr.bf16.mxu0 %v1980
    %2100 = vmatpush1.bf16.msra.mxu0 %v1979
    %2101 = vmatprep.subr.bf16.mxu0 %v1982
    %2102 = vmatpush1.bf16.msra.mxu0 %v1981
    %2103 = vmatprep.subr.bf16.mxu0 %v2042
    %2104 = vmatpush1.bf16.msra.mxu0 %v2039
    %2105 = vmatprep.subr.bf16.mxu0 0
    %2106 = vmatpush1.bf16.msra.mxu0 0
    %2107 = vmatprep.subr.bf16.mxu0 0
    %2108 = vmatpush1.bf16.msra.mxu0 0
    %2109 = vmatprep.subr.bf16.mxu0 0
    %2110 = vmatpush1.bf16.msra.mxu0 0
    %2111 = vmatprep.subr.bf16.mxu0 0
    %2112 = vmatpush1.bf16.msra.mxu0 0
    %2113 = vmatprep.subr.bf16.mxu0 0
    %2114 = vmatpush1.bf16.msra.mxu0 0
    %2115 = vmatprep.subr.bf16.mxu0 0
    %2116 = vmatpush1.bf16.msra.mxu0 0
    %2117 = vmatprep.subr.bf16.mxu0 0
    %2118 = vmatpush1.bf16.msra.mxu0 0
    %2119 = vmatprep.mubr.bf16.mxu0 %v2035
    %2120 = vmatmul.mubr.bf16.gmra.mrb[0].mxu0 %v1725
    %v2121 = vpop.f32.mrb[0].mxu0
    %v2122 = vadd.f32 %v2079, %v2121
    %v2123 = vpop.f32.mrb[0].mxu0
    %v2124 = vadd.f32 %v2081, %v2123
    %v2125 = vpop.f32.mrb[0].mxu0
    %v2126 = vadd.f32 %v2083, %v2125
    %v2127 = vpop.f32.mrb[0].mxu0
    %v2128 = vadd.f32 %v2085, %v2127
    %2129 = vdwg.mxu0
    %v2130 = vmax.f32 %v2122, 0.0
    %v2131 = vmax.f32 %v2124, 0.0
    %v2132 = vmax.f32 %v2126, 0.0
    %v2133 = vmax.f32 %v2128, 0.0
    %v2134 = vpack.c.bf16 %v2132, %v2130
    %v2135 = vpack.c.bf16 %v2133, %v2131
    %v2136 = vld [vmem:[#allocation11] sm:$0xf]
    %v2137 = vld [vmem:[#allocation11 + $0x4] sm:$0xf]
    %v2138 = vld [vmem:[#allocation11 + $0x8] sm:$0xf]
    %v2139 = vld [vmem:[#allocation11 + $0xc] sm:$0xf]
    %v2140 = vld [vmem:[#allocation11 + $0x10] sm:$0xf]
    %v2141 = vld [vmem:[#allocation11 + $0x14] sm:$0xf]
    %v2142 = vld [vmem:[#allocation11 + $0x18] sm:$0xf]
    %v2143 = vld [vmem:[#allocation11 + $0x1c] sm:$0xf]
    %v2144 = vld [vmem:[#allocation11 + $0x20] sm:$0xf]
    %v2145 = vld [vmem:[#allocation11 + $0x24] sm:$0xf]
    %v2146 = vld [vmem:[#allocation11 + $0x28] sm:$0xf]
    %v2147 = vld [vmem:[#allocation11 + $0x2c] sm:$0xf]
    %v2148 = vld [vmem:[#allocation11 + $0x30] sm:$0xf]
    %v2149 = vld [vmem:[#allocation11 + $0x34] sm:$0xf]
    %v2150 = vld [vmem:[#allocation11 + $0x38] sm:$0xf]
    %v2151 = vld [vmem:[#allocation11 + $0x3c] sm:$0xf]
    %v2152 = vld [vmem:[#allocation11 + $0x40] sm:$0xf]
    %v2153 = vld [vmem:[#allocation11 + $0x44] sm:$0xf]
    %v2154 = vld [vmem:[#allocation11 + $0x48] sm:$0xf]
    %v2155 = vld [vmem:[#allocation11 + $0x4c] sm:$0xf]
    %v2156 = vld [vmem:[#allocation11 + $0x50] sm:$0xf]
    %v2157 = vld [vmem:[#allocation11 + $0x54] sm:$0xf]
    %v2158 = vld [vmem:[#allocation11 + $0x58] sm:$0xf]
    %v2159 = vld [vmem:[#allocation11 + $0x5c] sm:$0xf]
    %v2160 = vld [vmem:[#allocation11 + $0x60] sm:$0xf]
    %v2161 = vld [vmem:[#allocation11 + $0x64] sm:$0xf]
    %v2162 = vld [vmem:[#allocation11 + $0x68] sm:$0xf]
    %v2163 = vld [vmem:[#allocation11 + $0x6c] sm:$0xf]
    %v2164 = vld [vmem:[#allocation11 + $0x70] sm:$0xf]
    %v2165 = vld [vmem:[#allocation11 + $0x74] sm:$0xf]
    %v2166 = vld [vmem:[#allocation11 + $0x78] sm:$0xf]
    %v2167 = vld [vmem:[#allocation11 + $0x7c] sm:$0xf]
    %v2168 = vld [vmem:[#allocation13] sm:$0x1]
    %v2170 = vlaneseq
    %v2171 = vshrl.u32 %v2170, 7
    %v2172 = vsub.s32 0, %v2171
    %v2173 = vrot.slane %v2168, %v2172
    %v2207 = vunpack.c.l.b16 %v2136
    %v2208 = vunpack.c.l.b16 %v2137
    %v2209 = vunpack.c.l.b16 %v2138
    %v2210 = vunpack.c.l.b16 %v2139
    %v2211 = vunpack.c.l.b16 %v2140
    %v2212 = vunpack.c.l.b16 %v2141
    %v2213 = vunpack.c.l.b16 %v2142
    %v2214 = vunpack.c.l.b16 %v2143
    %v2215 = vunpack.c.l.b16 %v2144
    %v2216 = vunpack.c.l.b16 %v2145
    %v2217 = vunpack.c.l.b16 %v2146
    %v2218 = vunpack.c.l.b16 %v2147
    %v2219 = vunpack.c.l.b16 %v2148
    %v2220 = vunpack.c.l.b16 %v2149
    %v2221 = vunpack.c.l.b16 %v2150
    %v2222 = vunpack.c.l.b16 %v2151
    %v2223 = vunpack.c.l.b16 %v2152
    %v2224 = vunpack.c.l.b16 %v2153
    %v2225 = vunpack.c.l.b16 %v2154
    %v2226 = vunpack.c.l.b16 %v2155
    %v2227 = vunpack.c.l.b16 %v2156
    %v2228 = vunpack.c.l.b16 %v2157
    %v2229 = vunpack.c.l.b16 %v2158
    %v2230 = vunpack.c.l.b16 %v2159
    %v2231 = vunpack.c.l.b16 %v2160
    %v2232 = vunpack.c.l.b16 %v2161
    %v2233 = vunpack.c.l.b16 %v2162
    %v2234 = vunpack.c.l.b16 %v2163
    %v2235 = vunpack.c.l.b16 %v2164
    %v2236 = vunpack.c.l.b16 %v2165
    %v2237 = vunpack.c.l.b16 %v2166
    %v2238 = vunpack.c.l.b16 %v2167
    %v2239 = vpack.c.b16 %v2208, %v2207
    %v2240 = vpack.c.b16 %v2210, %v2209
    %v2241 = vpack.c.b16 %v2212, %v2211
    %v2242 = vpack.c.b16 %v2214, %v2213
    %v2243 = vpack.c.b16 %v2216, %v2215
    %v2244 = vpack.c.b16 %v2218, %v2217
    %v2245 = vpack.c.b16 %v2220, %v2219
    %v2246 = vpack.c.b16 %v2222, %v2221
    %v2247 = vpack.c.b16 %v2224, %v2223
    %v2248 = vpack.c.b16 %v2226, %v2225
    %v2249 = vpack.c.b16 %v2228, %v2227
    %v2250 = vpack.c.b16 %v2230, %v2229
    %v2251 = vpack.c.b16 %v2232, %v2231
    %v2252 = vpack.c.b16 %v2234, %v2233
    %v2253 = vpack.c.b16 %v2236, %v2235
    %v2254 = vpack.c.b16 %v2238, %v2237
    %2271 = vmatprep.subr.bf16.mxu0 0
    %2272 = vmatpush1.bf16.msra.mxu0 %v2239
    %2273 = vmatprep.subr.bf16.mxu0 0
    %2274 = vmatpush1.bf16.msra.mxu0 %v2240
    %2275 = vmatprep.subr.bf16.mxu0 0
    %2276 = vmatpush1.bf16.msra.mxu0 %v2241
    %2277 = vmatprep.subr.bf16.mxu0 0
    %2278 = vmatpush1.bf16.msra.mxu0 %v2242
    %2279 = vmatprep.subr.bf16.mxu0 0
    %2280 = vmatpush1.bf16.msra.mxu0 %v2243
    %2281 = vmatprep.subr.bf16.mxu0 0
    %2282 = vmatpush1.bf16.msra.mxu0 %v2244
    %2283 = vmatprep.subr.bf16.mxu0 0
    %2284 = vmatpush1.bf16.msra.mxu0 %v2245
    %2285 = vmatprep.subr.bf16.mxu0 0
    %2286 = vmatpush1.bf16.msra.mxu0 %v2246
    %2287 = vmatprep.subr.bf16.mxu0 0
    %2288 = vmatpush1.bf16.msra.mxu0 %v2247
    %2289 = vmatprep.subr.bf16.mxu0 0
    %2290 = vmatpush1.bf16.msra.mxu0 %v2248
    %2291 = vmatprep.subr.bf16.mxu0 0
    %2292 = vmatpush1.bf16.msra.mxu0 %v2249
    %2293 = vmatprep.subr.bf16.mxu0 0
    %2294 = vmatpush1.bf16.msra.mxu0 %v2250
    %2295 = vmatprep.subr.bf16.mxu0 0
    %2296 = vmatpush1.bf16.msra.mxu0 %v2251
    %2297 = vmatprep.subr.bf16.mxu0 0
    %2298 = vmatpush1.bf16.msra.mxu0 %v2252
    %2299 = vmatprep.subr.bf16.mxu0 0
    %2300 = vmatpush1.bf16.msra.mxu0 %v2253
    %2301 = vmatprep.subr.bf16.mxu0 0
    %2302 = vmatpush1.bf16.msra.mxu0 %v2254
    %2303 = vmatprep.mubr.bf16.mxu0 %v2135
    %2304 = vmatmul.mubr.bf16.gmra.mrb[0].mxu0 %v2134
    %v2305 = vpop.f32.mrb[0].mxu0
    %v2306 = vadd.f32 %v2173, %v2305
    %v2307 = vpop.f32.mrb[0].mxu0
    %v2308 = vpop.f32.mrb[0].mxu0
    %v2309 = vadd.f32 %v2173, %v2308
    %v2310 = vpop.f32.mrb[0].mxu0
    %2311 = vdwg.mxu0
    %v2312 = vmax.f32 %v2306, 0.0
    %v2313 = vmax.f32 %v2309, 0.0
    %v2314 = vpack.c.bf16 %v2313, %v2312
    %v2315 = vld [vmem:[#allocation14] sm:$0xf]
    %v2316 = vld [vmem:[#allocation14 + $0x4] sm:$0xf]
    %v2317 = vld [vmem:[#allocation14 + $0x8] sm:$0xf]
    %v2318 = vld [vmem:[#allocation14 + $0xc] sm:$0xf]
    %v2319 = vld [vmem:[#allocation14 + $0x10] sm:$0xf]
    %v2320 = vld [vmem:[#allocation14 + $0x14] sm:$0xf]
    %v2321 = vld [vmem:[#allocation14 + $0x18] sm:$0xf]
    %v2322 = vld [vmem:[#allocation14 + $0x1c] sm:$0xf]
    %v2323 = vld [vmem:[#allocation14 + $0x20] sm:$0xf]
    %v2324 = vld [vmem:[#allocation14 + $0x24] sm:$0xf]
    %v2325 = vld [vmem:[#allocation14 + $0x28] sm:$0xf]
    %v2326 = vld [vmem:[#allocation14 + $0x2c] sm:$0xf]
    %v2327 = vld [vmem:[#allocation14 + $0x30] sm:$0xf]
    %v2328 = vld [vmem:[#allocation14 + $0x34] sm:$0xf]
    %v2329 = vld [vmem:[#allocation14 + $0x38] sm:$0xf]
    %v2330 = vld [vmem:[#allocation14 + $0x3c] sm:$0xf]
    %v2331 = vld [vmem:[#allocation16] sm:$0x1]
    %v2333 = vlaneseq
    %v2334 = vshrl.u32 %v2333, 7
    %v2335 = vsub.s32 0, %v2334
    %v2336 = vrot.slane %v2331, %v2335
    %v2354 = vunpack.c.l.b16 %v2315
    %v2355 = vunpack.c.l.b16 %v2316
    %v2356 = vunpack.c.l.b16 %v2317
    %v2357 = vunpack.c.l.b16 %v2318
    %v2358 = vunpack.c.l.b16 %v2319
    %v2359 = vunpack.c.l.b16 %v2320
    %v2360 = vunpack.c.l.b16 %v2321
    %v2361 = vunpack.c.l.b16 %v2322
    %v2362 = vunpack.c.l.b16 %v2323
    %v2363 = vunpack.c.l.b16 %v2324
    %v2364 = vunpack.c.l.b16 %v2325
    %v2365 = vunpack.c.l.b16 %v2326
    %v2366 = vunpack.c.l.b16 %v2327
    %v2367 = vunpack.c.l.b16 %v2328
    %v2368 = vunpack.c.l.b16 %v2329
    %v2369 = vunpack.c.l.b16 %v2330
    %v2370 = vpack.c.b16 %v2355, %v2354
    %v2371 = vpack.c.b16 %v2357, %v2356
    %v2372 = vpack.c.b16 %v2359, %v2358
    %v2373 = vpack.c.b16 %v2361, %v2360
    %v2374 = vpack.c.b16 %v2363, %v2362
    %v2375 = vpack.c.b16 %v2365, %v2364
    %v2376 = vpack.c.b16 %v2367, %v2366
    %v2377 = vpack.c.b16 %v2369, %v2368
    %2386 = vmatprep.subr.bf16.mxu0 0
    %2387 = vmatpush1.bf16.msra.mxu0 %v2370
    %2388 = vmatprep.subr.bf16.mxu0 0
    %2389 = vmatpush1.bf16.msra.mxu0 %v2371
    %2390 = vmatprep.subr.bf16.mxu0 0
    %2391 = vmatpush1.bf16.msra.mxu0 %v2372
    %2392 = vmatprep.subr.bf16.mxu0 0
    %2393 = vmatpush1.bf16.msra.mxu0 %v2373
    %2394 = vmatprep.subr.bf16.mxu0 0
    %2395 = vmatpush1.bf16.msra.mxu0 %v2374
    %2396 = vmatprep.subr.bf16.mxu0 0
    %2397 = vmatpush1.bf16.msra.mxu0 %v2375
    %2398 = vmatprep.subr.bf16.mxu0 0
    %2399 = vmatpush1.bf16.msra.mxu0 %v2376
    %2400 = vmatprep.subr.bf16.mxu0 0
    %2401 = vmatpush1.bf16.msra.mxu0 %v2377
    %2402 = vmatprep.subr.bf16.mxu0 0
    %2403 = vmatpush1.bf16.msra.mxu0 0
    %2404 = vmatprep.subr.bf16.mxu0 0
    %2405 = vmatpush1.bf16.msra.mxu0 0
    %2406 = vmatprep.subr.bf16.mxu0 0
    %2407 = vmatpush1.bf16.msra.mxu0 0
    %2408 = vmatprep.subr.bf16.mxu0 0
    %2409 = vmatpush1.bf16.msra.mxu0 0
    %2410 = vmatprep.subr.bf16.mxu0 0
    %2411 = vmatpush1.bf16.msra.mxu0 0
    %2412 = vmatprep.subr.bf16.mxu0 0
    %2413 = vmatpush1.bf16.msra.mxu0 0
    %2414 = vmatprep.subr.bf16.mxu0 0
    %2415 = vmatpush1.bf16.msra.mxu0 0
    %2416 = vmatprep.subr.bf16.mxu0 0
    %2417 = vmatpush1.bf16.msra.mxu0 0
    %2418 = vmatprep.mubr.bf16.mxu0 0
    %2419 = vmatmul.mubr.bf16.gmra.mrb[0].mxu0 %v2314
    %v2420 = vpop.f32.mrb[0].mxu0
    %v2421 = vadd.f32 %v2336, %v2420
    %v2422 = vpop.f32.mrb[0].mxu0
    %v2423 = vpop.f32.mrb[0].mxu0
    %v2424 = vadd.f32 %v2336, %v2423
    %v2425 = vpop.f32.mrb[0].mxu0
    %2426 = vdwg.mxu0
    %2427 = vst [vmem:[#allocation17] sm:$0xff] %v2421
    %2428 = vst [vmem:[#allocation17 + $0x8] sm:$0xff] %v2424
    // Predicated region
    $region74: #{tpu_custom_call.1} parent=1 // pred_check
      _
    $region75: #{tpu_custom_call.1} parent=1 // pred_check_branch
      %2430 = sbr.rel (0) target = $region77
    $region76: #{tpu_custom_call.1} parent=1 // pred_region
      %s2432 = ssub.s32 256, 256
      %2433 = vsyncadd [#allocation4], %s2432
      %s2434 = sshll.u32 [#allocation17], 4
      %s2435 = int_to_ptr.vmem [resolvable:$true] %s2434
      %2440 = dma.vmem_to_hbm [thread:$0]  %s2435, 256, %s9, [#allocation4], 128, 128, 8
    $region77: #{tpu_custom_call.1} parent=1 // pred_fallthru
      _
    // Predicated region
    $region78: #{tpu_custom_call.1} parent=1 // pred_check
      _
    $region79: #{tpu_custom_call.1} parent=1 // pred_check_branch
      %2442 = sbr.rel (0) target = $region81
    $region80: #{tpu_custom_call.1} parent=1 // pred_region
      %2443 = dma.done [#allocation4], 256
    $region81: #{tpu_custom_call.1} parent=1 // pred_fallthru
      _
    %2444 = vsyncpa [#allocation3], 1
    %2445 = vsyncpa [#allocation6], 1
    %2446 = vsyncpa [#allocation9], 1
    %2447 = vsyncpa [#allocation12], 1
    %2448 = vsyncpa [#allocation15], 1
    %2449 = vsyncpa [#allocation4], 1

</llo_original>
